<compile_context>
chip_gen: v7x
topology: tpu7x:2x2x1
jax: 0.10.0
libtpu: 0.0.40
codegen_flags: <defaults>
</compile_context>

<pallas_src>
import functools

import jax
import jax.numpy as jnp
from jax.experimental import pallas as pl
from jax.experimental.pallas import tpu as pltpu


def actor_forward_kernel(action_dim, x_ref, w1_ref, b1_ref, wh_ref, bh_ref, out_ref):
    """Fused (Linear+ReLU) backbone + folded packed (mean | log_std) head.

    Head output columns: [0:A] -> mean (identity), [A:2A] -> log_std
    (clamped + exp'd into std), rest -> zero padding (discarded by wrapper).
    A lane-index select applies the std transform only to the log_std columns,
    keeping the store full-width / unmasked.
    """
    x = x_ref[...]                                            # (bt, D0)

    # backbone layer 1: Linear + ReLU
    h1 = jnp.dot(x, w1_ref[...], preferred_element_type=jnp.float32) + b1_ref[...]
    h1 = jnp.maximum(h1, 0.0)                                 # (bt, D1), f32

    # folded layer-2 + heads: one matmul for mean and log_std
    head = jnp.dot(h1.astype(wh_ref.dtype), wh_ref[...],
                   preferred_element_type=jnp.float32) + bh_ref[...]

    # std transform (clip + exp on EUP); select mean vs std by lane index.
    std_like = jnp.exp(jnp.clip(head, -20.0, 2.0))
    col = jax.lax.broadcasted_iota(jnp.int32, head.shape, 1)
    out_ref[...] = jnp.where(col < action_dim, head, std_like).astype(out_ref.dtype)


def _num_tensorcores():
    """TensorCores per chip sharing this grid (v4 megacore / v7x -> 2, else 1)."""
    try:
        kind = jax.devices()[0].device_kind.lower()
    except Exception:
        return 1
    return 2 if ("v4" in kind or "v7" in kind or "7x" in kind) else 1


def _pick_batch_tile(batch, n_cores, max_tile=8192):
    """Smallest grid-step count: full batch on single-TC, batch/2 on dual-TC."""
    candidates = []
    if n_cores > 1 and batch % n_cores == 0:
        candidates.append(batch // n_cores)
    candidates.append(batch)                        # single step
    candidates.extend((4096, 2048, 1024, 512, 256, 128, 64, 32, 16, 8))
    for bt in candidates:
        if bt <= max_tile and batch % bt == 0 and (bt % 8 == 0 or bt == batch):
            return bt
    return batch


def pack_actor_params(params, matmul_dtype=jnp.float32):
    """Pack raw per-layer params into kernel params.

    - Heads merged into one lane-padded (D2, P) matrix, P = multiple of 128.
    - Layer-2 Linear folded into the head: W2h = w2 @ wh, b2h = b2 @ wh + bh.
    - Matmul operands optionally cast to bf16 (biases stay f32).
    """
    w1, b1, w2, b2, wm, bm, ws, bs = params
    d2, a = wm.shape
    p = ((2 * a + 127) // 128) * 128  # pad head width to a multiple of 128 lanes
    wh = jnp.zeros((d2, p), jnp.float32).at[:, :a].set(wm).at[:, a:2 * a].set(ws)
    bh = jnp.zeros((1, p), jnp.float32).at[:, :a].set(bm).at[:, a:2 * a].set(bs)
    w2h = w2 @ wh                      # (D1, P)
    b2h = b2 @ wh + bh                 # (1, P)
    return (w1.astype(matmul_dtype), b1, w2h.astype(matmul_dtype), b2h), a


def actor_forward(state, packed_params, action_dim):
    """Wrapper: returns (mean, std) of the Normal distribution."""
    w1, b1, w2h, b2h = packed_params
    B, D0 = state.shape
    D1 = w1.shape[1]
    P = w2h.shape[1]

    if state.dtype != w1.dtype:
        state = state.astype(w1.dtype)

    n_cores = _num_tensorcores()
    bt = _pick_batch_tile(B, n_cores)
    grid = (B // bt,)

    wbytes = jnp.dtype(w1.dtype).itemsize
    cost = pl.CostEstimate(
        flops=2 * B * (D0 * D1 + D1 * P),
        transcendentals=B * 2 * action_dim,
        bytes_accessed=(wbytes * (B * D0 + D0 * D1 + D1 * P)
                        + 4 * (D1 + P) + 4 * B * P),
    )

    fused = pl.pallas_call(
        functools.partial(actor_forward_kernel, action_dim),
        out_shape=jax.ShapeDtypeStruct((B, P), jnp.float32),
        grid_spec=pltpu.PrefetchScalarGridSpec(
            num_scalar_prefetch=0,
            grid=grid,
            in_specs=[
                pl.BlockSpec((bt, D0), lambda i: (i, 0)),   # x        (tiled)
                pl.BlockSpec((D0, D1), lambda i: (0, 0)),   # w1       (resident)
                pl.BlockSpec((1, D1), lambda i: (0, 0)),    # b1
                pl.BlockSpec((D1, P), lambda i: (0, 0)),    # folded head weights
                pl.BlockSpec((1, P), lambda i: (0, 0)),     # folded head bias
            ],
            out_specs=pl.BlockSpec((bt, P), lambda i: (i, 0)),
        ),
        compiler_params=pltpu.CompilerParams(
            dimension_semantics=("parallel",),   # dual-TC chips shard the batch
        ),
        cost_estimate=cost,
    )(state, w1, b1, w2h, b2h)

    # Single pass over the padded output, then cheap slices of the small slab.
    head = fused[:, :2 * action_dim]
    return head[:, :action_dim], head[:, action_dim:]


def init_actor_params(key, hidden_dims, output_dim):
    """Deterministic synthetic parameter init (shapes match nn.Linear layers).

    Weights are stored transposed relative to PyTorch: (in_features, out_features).
    Biases are stored as (1, out_features) for clean TPU broadcasting.
    """
    d0, d1, d2 = hidden_dims
    keys = jax.random.split(key, 8)

    def lin(kw, kb, fan_in, fan_out):
        bound = 1.0 / jnp.sqrt(fan_in)
        w = jax.random.uniform(kw, (fan_in, fan_out), jnp.float32, -bound, bound)
        b = jax.random.uniform(kb, (1, fan_out), jnp.float32, -bound, bound)
        return w, b

    w1, b1 = lin(keys[0], keys[1], d0, d1)
    w2, b2 = lin(keys[2], keys[3], d1, d2)
    wm, bm = lin(keys[4], keys[5], d2, output_dim)
    ws, bs = lin(keys[6], keys[7], d2, output_dim)
    return (w1, b1, w2, b2, wm, bm, ws, bs)


def actor_forward_ref(state, params):
    """Plain-JAX reference for correctness check (raw, unfolded params)."""
    w1, b1, w2, b2, wm, bm, ws, bs = params
    h1 = jnp.maximum(state @ w1 + b1, 0.0)
    h2 = h1 @ w2 + b2
    mean = h2 @ wm + bm
    log_std = jnp.clip(h2 @ ws + bs, -20.0, 2.0)
    return mean, jnp.exp(log_std)


if __name__ == "__main__":
    # Small SAC-style shapes: hidden_dims = [obs_dim, h1, h2], output_dim = action_dim
    hidden_dims = (16, 64, 64)
    output_dim = 8
    batch = 512          # single-TC: grid=(1,); dual-TC: grid=(2,), parallel axis
    max_action = 2.0     # unused in forward (only in sample()); kept for parity

    key = jax.random.PRNGKey(0)
    k_state, k_params = jax.random.split(key)
    state = jax.random.normal(k_state, (batch, hidden_dims[0]), jnp.float32)
    raw_params = init_actor_params(k_params, hidden_dims, output_dim)

    # f32 matmul operands by default; pass matmul_dtype=jnp.bfloat16 on v6e/v7x
    # for ~3x fewer MXU passes (loosen tolerances accordingly).
    packed_params, action_dim = pack_actor_params(raw_params)

    mean, std = actor_forward(state, packed_params, action_dim)
    jax.block_until_ready((mean, std))

    mean_ref, std_ref = actor_forward_ref(state, raw_params)
    assert mean.shape == (batch, output_dim) and std.shape == (batch, output_dim)
    # Layer-2 fold changes accumulation order slightly -> tolerance 1e-4.
    assert jnp.allclose(mean, mean_ref, atol=1e-4, rtol=1e-4)
    assert jnp.allclose(std, std_ref, atol=1e-4, rtol=1e-4)

    # TODO(synk): Actor.sample() (rsample + tanh squash + log_prob) needs RNG /
    # distribution sampling; only forward() (distribution parameters) is kernelized.
    print("KERNEL_OK")
</pallas_src>

<mosaic_0001>
module attributes {stable_mosaic.version = 11 : i64} {
  func.func @actor_forward_kernel(%arg0: i32, %arg1: memref<512x16xf32, #tpu.memory_space<vmem>>, %arg2: memref<16x64xf32, #tpu.memory_space<vmem>>, %arg3: memref<1x64xf32, #tpu.memory_space<vmem>>, %arg4: memref<64x128xf32, #tpu.memory_space<vmem>>, %arg5: memref<1x128xf32, #tpu.memory_space<vmem>>, %arg6: memref<512x128xf32, #tpu.memory_space<vmem>>) attributes {dimension_semantics = [#tpu.dimension_semantics<parallel>], iteration_bounds = array<i64: 1>, scalar_prefetch = 0 : i64, scratch_operands = 0 : i64, tpu.core_type = #tpu.core_type<tc>, window_params = [{transform_indices = @transform_0, window_bounds = array<i64: 512, 16>}, {pipeline_mode = #tpu.pipeline_mode<synchronous>, transform_indices = @transform_1, window_bounds = array<i64: 16, 64>}, {pipeline_mode = #tpu.pipeline_mode<synchronous>, transform_indices = @transform_2, window_bounds = array<i64: 1, 64>}, {pipeline_mode = #tpu.pipeline_mode<synchronous>, transform_indices = @transform_3, window_bounds = array<i64: 64, 128>}, {pipeline_mode = #tpu.pipeline_mode<synchronous>, transform_indices = @transform_4, window_bounds = array<i64: 1, 128>}, {transform_indices = @transform_5, window_bounds = array<i64: 512, 128>}]} {
    %c0 = arith.constant 0 : index
    %c0_0 = arith.constant 0 : index
    %0 = vector.load %arg1[%c0, %c0_0] : memref<512x16xf32, #tpu.memory_space<vmem>>, vector<512x16xf32>
    %c0_1 = arith.constant 0 : index
    %c0_2 = arith.constant 0 : index
    %1 = vector.load %arg2[%c0_1, %c0_2] : memref<16x64xf32, #tpu.memory_space<vmem>>, vector<16x64xf32>
    %cst = arith.constant dense<0.000000e+00> : vector<512x64xf32>
    %2 = tpu.matmul %0, %1, %cst {dimension_numbers = #tpu.dot_dimension_numbers<[1], [0], [0], [1], [0, 0, 1, 1], [], []>} : vector<512x16xf32>, vector<16x64xf32>, vector<512x64xf32> -> vector<512x64xf32>
    %c0_3 = arith.constant 0 : index
    %c0_4 = arith.constant 0 : index
    %3 = vector.load %arg3[%c0_3, %c0_4] : memref<1x64xf32, #tpu.memory_space<vmem>>, vector<1x64xf32>
    %4 = vector.broadcast %3 : vector<1x64xf32> to vector<512x64xf32>
    %5 = arith.addf %2, %4 : vector<512x64xf32>
    %cst_5 = arith.constant 0.000000e+00 : f32
    %6 = vector.broadcast %cst_5 : f32 to vector<512x64xf32>
    %7 = arith.maximumf %5, %6 : vector<512x64xf32>
    %c0_6 = arith.constant 0 : index
    %c0_7 = arith.constant 0 : index
    %8 = vector.load %arg4[%c0_6, %c0_7] : memref<64x128xf32, #tpu.memory_space<vmem>>, vector<64x128xf32>
    %cst_8 = arith.constant dense<0.000000e+00> : vector<512x128xf32>
    %9 = tpu.matmul %7, %8, %cst_8 {dimension_numbers = #tpu.dot_dimension_numbers<[1], [0], [0], [1], [0, 0, 1, 1], [], []>} : vector<512x64xf32>, vector<64x128xf32>, vector<512x128xf32> -> vector<512x128xf32>
    %c0_9 = arith.constant 0 : index
    %c0_10 = arith.constant 0 : index
    %10 = vector.load %arg5[%c0_9, %c0_10] : memref<1x128xf32, #tpu.memory_space<vmem>>, vector<1x128xf32>
    %11 = vector.broadcast %10 : vector<1x128xf32> to vector<512x128xf32>
    %12 = arith.addf %9, %11 : vector<512x128xf32>
    %cst_11 = arith.constant -2.000000e+01 : f32
    %cst_12 = arith.constant 2.000000e+00 : f32
    %13 = vector.broadcast %cst_11 : f32 to vector<512x128xf32>
    %14 = arith.maximumf %13, %12 : vector<512x128xf32>
    %15 = vector.broadcast %cst_12 : f32 to vector<512x128xf32>
    %16 = arith.minimumf %15, %14 : vector<512x128xf32>
    %17 = math.exp %16 : vector<512x128xf32>
    %18 = tpu.iota {dimensions = array<i32: 1>} : vector<512x128xi32>
    %c8_i32 = arith.constant 8 : i32
    %19 = vector.broadcast %c8_i32 : i32 to vector<512x128xi32>
    %20 = arith.cmpi slt, %18, %19 : vector<512x128xi32>
    %21 = arith.select %20, %12, %17 : vector<512x128xi1>, vector<512x128xf32>
    %c0_13 = arith.constant 0 : index
    %c0_14 = arith.constant 0 : index
    %22 = vector.load %arg6[%c0_13, %c0_14] : memref<512x128xf32, #tpu.memory_space<vmem>>, vector<512x128xf32>
    tpu.vector_store %arg6[%c0_13, %c0_14], %21 {strides = array<i32>} : memref<512x128xf32, #tpu.memory_space<vmem>>, vector<512x128xf32>,
    return
  }
  func.func @transform_0(%arg0: i32) -> (i32, i32) {
    %c0_i32 = arith.constant 0 : i32
    %c0_i32_0 = arith.constant 0 : i32
    return %arg0, %c0_i32 : i32, i32
  }
  func.func @transform_1(%arg0: i32) -> (i32, i32) {
    %c0_i32 = arith.constant 0 : i32
    %c0_i32_0 = arith.constant 0 : i32
    %c0_i32_1 = arith.constant 0 : i32
    return %c0_i32, %c0_i32_0 : i32, i32
  }
  func.func @transform_2(%arg0: i32) -> (i32, i32) {
    %c0_i32 = arith.constant 0 : i32
    %c0_i32_0 = arith.constant 0 : i32
    %c0_i32_1 = arith.constant 0 : i32
    return %c0_i32, %c0_i32_0 : i32, i32
  }
  func.func @transform_3(%arg0: i32) -> (i32, i32) {
    %c0_i32 = arith.constant 0 : i32
    %c0_i32_0 = arith.constant 0 : i32
    %c0_i32_1 = arith.constant 0 : i32
    return %c0_i32, %c0_i32_0 : i32, i32
  }
  func.func @transform_4(%arg0: i32) -> (i32, i32) {
    %c0_i32 = arith.constant 0 : i32
    %c0_i32_0 = arith.constant 0 : i32
    %c0_i32_1 = arith.constant 0 : i32
    return %c0_i32, %c0_i32_0 : i32, i32
  }
  func.func @transform_5(%arg0: i32) -> (i32, i32) {
    %c0_i32 = arith.constant 0 : i32
    %c0_i32_0 = arith.constant 0 : i32
    return %arg0, %c0_i32 : i32, i32
  }
}

</mosaic_0001>

<llo_original>
// kernel: tpu_custom_call.1
$region0: #{tpu_custom_call.1}
  #allocation0 [shape = 'u32[]', space=smem, size = 0x4, offset = 0x4, fixed_abs, tag = 'smem constant byte address 0x4 - core index']
  #allocation1 [shape = 'u32[144,128]{1,0:T(1,128)}', space=vmem, size = 0x12000, scoped, tag = 'internal scratch']
  %s0 = inlined_call_operand.vmem [shape: f32[512,16], index: 0, kind: input, shape index: {}]
  %s1 = inlined_call_operand.vmem [shape: f32[16,64], index: 1, kind: input, shape index: {}]
  %s2 = inlined_call_operand.vmem [shape: f32[1,64], index: 2, kind: input, shape index: {}]
  %s3 = inlined_call_operand.vmem [shape: f32[64,128], index: 3, kind: input, shape index: {}]
  %s4 = inlined_call_operand.vmem [shape: f32[1,128], index: 4, kind: input, shape index: {}]
  %s5 = inlined_call_operand.hbm [shape: f32[512,128], index: 5, kind: output, shape index: {}]
  %s6 = sld [smem:[#allocation0]]
  $region30: #{tpu_custom_call.1} parent=0
    _
  %s8 = ssub.s32 1, %s6
  %s9 = scalar_select 0, %s8, %s6
  $region1: #{tpu_custom_call.1} parent=0
    #allocation2 [shape = 'u8[262144]{0}', space=vmem, size = 0x40000, scoped, tag = 'output window, operand 0, single buffered']
    #allocation3 [shape = 's32[1]{0}', space=sflag, size = 0x4, scoped, tag = 'scoped memory for tpu_custom_call.1']
    %10 = vsyncpa [#allocation3], 0
    // Predicated region
    $region2: #{tpu_custom_call.1} parent=1 // pred_check
      _
    $region3: #{tpu_custom_call.1} parent=1 // pred_check_branch
      %12 = sbr.rel (0) target = $region5
    $region4: #{tpu_custom_call.1} parent=1 // pred_region
      _
    $region5: #{tpu_custom_call.1} parent=1 // pred_fallthru
      _
    // Predicated region
    $region6: #{tpu_custom_call.1} parent=1 // pred_check
      _
    $region7: #{tpu_custom_call.1} parent=1 // pred_check_branch
      %14 = sbr.rel (0) target = $region9
    $region8: #{tpu_custom_call.1} parent=1 // pred_region
      _
    $region9: #{tpu_custom_call.1} parent=1 // pred_fallthru
      _
    // Predicated region
    $region10: #{tpu_custom_call.1} parent=1 // pred_check
      _
    $region11: #{tpu_custom_call.1} parent=1 // pred_check_branch
      %16 = sbr.rel (0) target = $region13
    $region12: #{tpu_custom_call.1} parent=1 // pred_region
      _
    $region13: #{tpu_custom_call.1} parent=1 // pred_fallthru
      _
    // Predicated region
    $region14: #{tpu_custom_call.1} parent=1 // pred_check
      _
    $region15: #{tpu_custom_call.1} parent=1 // pred_check_branch
      %18 = sbr.rel (0) target = $region17
    $region16: #{tpu_custom_call.1} parent=1 // pred_region
      _
    $region17: #{tpu_custom_call.1} parent=1 // pred_fallthru
      _
    // Predicated region
    $region18: #{tpu_custom_call.1} parent=1 // pred_check
      _
    $region19: #{tpu_custom_call.1} parent=1 // pred_check_branch
      %20 = sbr.rel (0) target = $region21
    $region20: #{tpu_custom_call.1} parent=1 // pred_region
      _
    $region21: #{tpu_custom_call.1} parent=1 // pred_fallthru
      _
    %v21 = vld [vmem:[%s0] sm:$0xff]
    %v22 = vld [vmem:[%s0 + $0x8] sm:$0xff]
    %v23 = vld [vmem:[%s0 + $0x10] sm:$0xff]
    %v24 = vld [vmem:[%s0 + $0x18] sm:$0xff]
    %v25 = vld [vmem:[%s0 + $0x20] sm:$0xff]
    %v26 = vld [vmem:[%s0 + $0x28] sm:$0xff]
    %v27 = vld [vmem:[%s0 + $0x30] sm:$0xff]
    %v28 = vld [vmem:[%s0 + $0x38] sm:$0xff]
    %v29 = vld [vmem:[%s0 + $0x40] sm:$0xff]
    %v30 = vld [vmem:[%s0 + $0x48] sm:$0xff]
    %v31 = vld [vmem:[%s0 + $0x50] sm:$0xff]
    %v32 = vld [vmem:[%s0 + $0x58] sm:$0xff]
    %v33 = vld [vmem:[%s0 + $0x60] sm:$0xff]
    %v34 = vld [vmem:[%s0 + $0x68] sm:$0xff]
    %v35 = vld [vmem:[%s0 + $0x70] sm:$0xff]
    %v36 = vld [vmem:[%s0 + $0x78] sm:$0xff]
    %v37 = vld [vmem:[%s0 + $0x80] sm:$0xff]
    %v38 = vld [vmem:[%s0 + $0x88] sm:$0xff]
    %v39 = vld [vmem:[%s0 + $0x90] sm:$0xff]
    %v40 = vld [vmem:[%s0 + $0x98] sm:$0xff]
    %v41 = vld [vmem:[%s0 + $0xa0] sm:$0xff]
    %v42 = vld [vmem:[%s0 + $0xa8] sm:$0xff]
    %v43 = vld [vmem:[%s0 + $0xb0] sm:$0xff]
    %v44 = vld [vmem:[%s0 + $0xb8] sm:$0xff]
    %v45 = vld [vmem:[%s0 + $0xc0] sm:$0xff]
    %v46 = vld [vmem:[%s0 + $0xc8] sm:$0xff]
    %v47 = vld [vmem:[%s0 + $0xd0] sm:$0xff]
    %v48 = vld [vmem:[%s0 + $0xd8] sm:$0xff]
    %v49 = vld [vmem:[%s0 + $0xe0] sm:$0xff]
    %v50 = vld [vmem:[%s0 + $0xe8] sm:$0xff]
    %v51 = vld [vmem:[%s0 + $0xf0] sm:$0xff]
    %v52 = vld [vmem:[%s0 + $0xf8] sm:$0xff]
    %v53 = vld [vmem:[%s0 + $0x100] sm:$0xff]
    %v54 = vld [vmem:[%s0 + $0x108] sm:$0xff]
    %v55 = vld [vmem:[%s0 + $0x110] sm:$0xff]
    %v56 = vld [vmem:[%s0 + $0x118] sm:$0xff]
    %v57 = vld [vmem:[%s0 + $0x120] sm:$0xff]
    %v58 = vld [vmem:[%s0 + $0x128] sm:$0xff]
    %v59 = vld [vmem:[%s0 + $0x130] sm:$0xff]
    %v60 = vld [vmem:[%s0 + $0x138] sm:$0xff]
    %v61 = vld [vmem:[%s0 + $0x140] sm:$0xff]
    %v62 = vld [vmem:[%s0 + $0x148] sm:$0xff]
    %v63 = vld [vmem:[%s0 + $0x150] sm:$0xff]
    %v64 = vld [vmem:[%s0 + $0x158] sm:$0xff]
    %v65 = vld [vmem:[%s0 + $0x160] sm:$0xff]
    %v66 = vld [vmem:[%s0 + $0x168] sm:$0xff]
    %v67 = vld [vmem:[%s0 + $0x170] sm:$0xff]
    %v68 = vld [vmem:[%s0 + $0x178] sm:$0xff]
    %v69 = vld [vmem:[%s0 + $0x180] sm:$0xff]
    %v70 = vld [vmem:[%s0 + $0x188] sm:$0xff]
    %v71 = vld [vmem:[%s0 + $0x190] sm:$0xff]
    %v72 = vld [vmem:[%s0 + $0x198] sm:$0xff]
    %v73 = vld [vmem:[%s0 + $0x1a0] sm:$0xff]
    %v74 = vld [vmem:[%s0 + $0x1a8] sm:$0xff]
    %v75 = vld [vmem:[%s0 + $0x1b0] sm:$0xff]
    %v76 = vld [vmem:[%s0 + $0x1b8] sm:$0xff]
    %v77 = vld [vmem:[%s0 + $0x1c0] sm:$0xff]
    %v78 = vld [vmem:[%s0 + $0x1c8] sm:$0xff]
    %v79 = vld [vmem:[%s0 + $0x1d0] sm:$0xff]
    %v80 = vld [vmem:[%s0 + $0x1d8] sm:$0xff]
    %v81 = vld [vmem:[%s0 + $0x1e0] sm:$0xff]
    %v82 = vld [vmem:[%s0 + $0x1e8] sm:$0xff]
    %v83 = vld [vmem:[%s0 + $0x1f0] sm:$0xff]
    %v84 = vld [vmem:[%s0 + $0x1f8] sm:$0xff]
    %v85 = vld [vmem:[%s1] sm:$0xff]
    %v86 = vld [vmem:[%s1 + $0x8] sm:$0xff]
    %v87 = vld [vmem:[%s2] sm:$0x1]
    %v89 = vlaneseq
    %v90 = vshrl.u32 %v89, 7
    %v91 = vsub.s32 0, %v90
    %v92 = vrot.slane %v87, %v91
    %vm94 = vcmask 130048
    %v96 = vsel %vm94, %v21, 0
    %v99 = vsel %vm94, %v22, 0
    %v102 = vsel %vm94, %v23, 0
    %v105 = vsel %vm94, %v24, 0
    %v108 = vsel %vm94, %v25, 0
    %v111 = vsel %vm94, %v26, 0
    %v114 = vsel %vm94, %v27, 0
    %v117 = vsel %vm94, %v28, 0
    %v120 = vsel %vm94, %v29, 0
    %v123 = vsel %vm94, %v30, 0
    %v126 = vsel %vm94, %v31, 0
    %v129 = vsel %vm94, %v32, 0
    %v132 = vsel %vm94, %v33, 0
    %v135 = vsel %vm94, %v34, 0
    %v138 = vsel %vm94, %v35, 0
    %v141 = vsel %vm94, %v36, 0
    %v144 = vsel %vm94, %v37, 0
    %v147 = vsel %vm94, %v38, 0
    %v150 = vsel %vm94, %v39, 0
    %v153 = vsel %vm94, %v40, 0
    %v156 = vsel %vm94, %v41, 0
    %v159 = vsel %vm94, %v42, 0
    %v162 = vsel %vm94, %v43, 0
    %v165 = vsel %vm94, %v44, 0
    %v168 = vsel %vm94, %v45, 0
    %v171 = vsel %vm94, %v46, 0
    %v174 = vsel %vm94, %v47, 0
    %v177 = vsel %vm94, %v48, 0
    %v180 = vsel %vm94, %v49, 0
    %v183 = vsel %vm94, %v50, 0
    %v186 = vsel %vm94, %v51, 0
    %v189 = vsel %vm94, %v52, 0
    %v192 = vsel %vm94, %v53, 0
    %v195 = vsel %vm94, %v54, 0
    %v198 = vsel %vm94, %v55, 0
    %v201 = vsel %vm94, %v56, 0
    %v204 = vsel %vm94, %v57, 0
    %v207 = vsel %vm94, %v58, 0
    %v210 = vsel %vm94, %v59, 0
    %v213 = vsel %vm94, %v60, 0
    %v216 = vsel %vm94, %v61, 0
    %v219 = vsel %vm94, %v62, 0
    %v222 = vsel %vm94, %v63, 0
    %v225 = vsel %vm94, %v64, 0
    %v228 = vsel %vm94, %v65, 0
    %v231 = vsel %vm94, %v66, 0
    %v234 = vsel %vm94, %v67, 0
    %v237 = vsel %vm94, %v68, 0
    %v240 = vsel %vm94, %v69, 0
    %v243 = vsel %vm94, %v70, 0
    %v246 = vsel %vm94, %v71, 0
    %v249 = vsel %vm94, %v72, 0
    %v252 = vsel %vm94, %v73, 0
    %v255 = vsel %vm94, %v74, 0
    %v258 = vsel %vm94, %v75, 0
    %v261 = vsel %vm94, %v76, 0
    %v264 = vsel %vm94, %v77, 0
    %v267 = vsel %vm94, %v78, 0
    %v270 = vsel %vm94, %v79, 0
    %v273 = vsel %vm94, %v80, 0
    %v276 = vsel %vm94, %v81, 0
    %v279 = vsel %vm94, %v82, 0
    %v282 = vsel %vm94, %v83, 0
    %v285 = vsel %vm94, %v84, 0
    %287 = vmatprep.subr.mxu0 0.0
    %288 = vmatpush1.msra.mxu0 %v85
    %289 = vmatprep.subr.mxu0 0.0
    %290 = vmatpush1.msra.mxu0 %v86
    %291 = vmatprep.subr.mxu0 0.0
    %292 = vmatpush1.msra.mxu0 0.0
    %293 = vmatprep.subr.mxu0 0.0
    %294 = vmatpush1.msra.mxu0 0.0
    %295 = vmatprep.subr.mxu0 0.0
    %296 = vmatpush1.msra.mxu0 0.0
    %297 = vmatprep.subr.mxu0 0.0
    %298 = vmatpush1.msra.mxu0 0.0
    %299 = vmatprep.subr.mxu0 0.0
    %300 = vmatpush1.msra.mxu0 0.0
    %301 = vmatprep.subr.mxu0 0.0
    %302 = vmatpush1.msra.mxu0 0.0
    %303 = vmatprep.subr.mxu0 0.0
    %304 = vmatpush1.msra.mxu0 0.0
    %305 = vmatprep.subr.mxu0 0.0
    %306 = vmatpush1.msra.mxu0 0.0
    %307 = vmatprep.subr.mxu0 0.0
    %308 = vmatpush1.msra.mxu0 0.0
    %309 = vmatprep.subr.mxu0 0.0
    %310 = vmatpush1.msra.mxu0 0.0
    %311 = vmatprep.subr.mxu0 0.0
    %312 = vmatpush1.msra.mxu0 0.0
    %313 = vmatprep.subr.mxu0 0.0
    %314 = vmatpush1.msra.mxu0 0.0
    %315 = vmatprep.subr.mxu0 0.0
    %316 = vmatpush1.msra.mxu0 0.0
    %317 = vmatprep.subr.mxu0 0.0
    %318 = vmatpush1.msra.mxu0 0.0
    %319 = vmatprep.subr.mxu0 0.0
    %320 = vmatpush1.msra.mxu0 0.0
    %321 = vmatprep.subr.mxu0 0.0
    %322 = vmatpush1.msra.mxu0 0.0
    %323 = vmatprep.subr.mxu0 0.0
    %324 = vmatpush1.msra.mxu0 0.0
    %325 = vmatprep.subr.mxu0 0.0
    %326 = vmatpush1.msra.mxu0 0.0
    %327 = vmatprep.subr.mxu0 0.0
    %328 = vmatpush1.msra.mxu0 0.0
    %329 = vmatprep.subr.mxu0 0.0
    %330 = vmatpush1.msra.mxu0 0.0
    %331 = vmatprep.subr.mxu0 0.0
    %332 = vmatpush1.msra.mxu0 0.0
    %333 = vmatprep.subr.mxu0 0.0
    %334 = vmatpush1.msra.mxu0 0.0
    %335 = vmatprep.subr.mxu0 0.0
    %336 = vmatpush1.msra.mxu0 0.0
    %337 = vmatprep.subr.mxu0 0.0
    %338 = vmatpush1.msra.mxu0 0.0
    %339 = vmatprep.subr.mxu0 0.0
    %340 = vmatpush1.msra.mxu0 0.0
    %341 = vmatprep.subr.mxu0 0.0
    %342 = vmatpush1.msra.mxu0 0.0
    %343 = vmatprep.subr.mxu0 0.0
    %344 = vmatpush1.msra.mxu0 0.0
    %345 = vmatprep.subr.mxu0 0.0
    %346 = vmatpush1.msra.mxu0 0.0
    %347 = vmatprep.subr.mxu0 0.0
    %348 = vmatpush1.msra.mxu0 0.0
    %349 = vmatprep.subr.mxu0 0.0
    %350 = vmatpush1.msra.mxu0 0.0
    %351 = vmatprep.mubr.f32.mxu0 0.0
    %352 = vmatmul.mubr.f32.gmra.mrb[0].mxu0 %v96
    %v353 = vpop.f32.mrb[0].mxu0
    %v354 = vadd.f32 %v92, %v353
    %v355 = vpop.f32.mrb[0].mxu0
    %356 = vmatprep.mubr.f32.mxu0 0.0
    %357 = vmatmul.mubr.f32.gmra.mrb[0].mxu0 %v99
    %v358 = vpop.f32.mrb[0].mxu0
    %v359 = vadd.f32 %v92, %v358
    %v360 = vpop.f32.mrb[0].mxu0
    %361 = vmatprep.mubr.f32.mxu0 0.0
    %362 = vmatmul.mubr.f32.gmra.mrb[0].mxu0 %v102
    %v363 = vpop.f32.mrb[0].mxu0
    %v364 = vadd.f32 %v92, %v363
    %v365 = vpop.f32.mrb[0].mxu0
    %366 = vmatprep.mubr.f32.mxu0 0.0
    %367 = vmatmul.mubr.f32.gmra.mrb[0].mxu0 %v105
    %v368 = vpop.f32.mrb[0].mxu0
    %v369 = vadd.f32 %v92, %v368
    %v370 = vpop.f32.mrb[0].mxu0
    %371 = vmatprep.mubr.f32.mxu0 0.0
    %372 = vmatmul.mubr.f32.gmra.mrb[0].mxu0 %v108
    %v373 = vpop.f32.mrb[0].mxu0
    %v374 = vadd.f32 %v92, %v373
    %v375 = vpop.f32.mrb[0].mxu0
    %376 = vmatprep.mubr.f32.mxu0 0.0
    %377 = vmatmul.mubr.f32.gmra.mrb[0].mxu0 %v111
    %v378 = vpop.f32.mrb[0].mxu0
    %v379 = vadd.f32 %v92, %v378
    %v380 = vpop.f32.mrb[0].mxu0
    %381 = vmatprep.mubr.f32.mxu0 0.0
    %382 = vmatmul.mubr.f32.gmra.mrb[0].mxu0 %v114
    %v383 = vpop.f32.mrb[0].mxu0
    %v384 = vadd.f32 %v92, %v383
    %v385 = vpop.f32.mrb[0].mxu0
    %386 = vmatprep.mubr.f32.mxu0 0.0
    %387 = vmatmul.mubr.f32.gmra.mrb[0].mxu0 %v117
    %v388 = vpop.f32.mrb[0].mxu0
    %v389 = vadd.f32 %v92, %v388
    %v390 = vpop.f32.mrb[0].mxu0
    %391 = vmatprep.mubr.f32.mxu0 0.0
    %392 = vmatmul.mubr.f32.gmra.mrb[0].mxu0 %v120
    %v393 = vpop.f32.mrb[0].mxu0
    %v394 = vadd.f32 %v92, %v393
    %v395 = vpop.f32.mrb[0].mxu0
    %396 = vmatprep.mubr.f32.mxu0 0.0
    %397 = vmatmul.mubr.f32.gmra.mrb[0].mxu0 %v123
    %v398 = vpop.f32.mrb[0].mxu0
    %v399 = vadd.f32 %v92, %v398
    %v400 = vpop.f32.mrb[0].mxu0
    %401 = vmatprep.mubr.f32.mxu0 0.0
    %402 = vmatmul.mubr.f32.gmra.mrb[0].mxu0 %v126
    %v403 = vpop.f32.mrb[0].mxu0
    %v404 = vadd.f32 %v92, %v403
    %v405 = vpop.f32.mrb[0].mxu0
    %406 = vmatprep.mubr.f32.mxu0 0.0
    %407 = vmatmul.mubr.f32.gmra.mrb[0].mxu0 %v129
    %v408 = vpop.f32.mrb[0].mxu0
    %v409 = vadd.f32 %v92, %v408
    %v410 = vpop.f32.mrb[0].mxu0
    %411 = vmatprep.mubr.f32.mxu0 0.0
    %412 = vmatmul.mubr.f32.gmra.mrb[0].mxu0 %v132
    %v413 = vpop.f32.mrb[0].mxu0
    %v414 = vadd.f32 %v92, %v413
    %v415 = vpop.f32.mrb[0].mxu0
    %416 = vmatprep.mubr.f32.mxu0 0.0
    %417 = vmatmul.mubr.f32.gmra.mrb[0].mxu0 %v135
    %v418 = vpop.f32.mrb[0].mxu0
    %v419 = vadd.f32 %v92, %v418
    %v420 = vpop.f32.mrb[0].mxu0
    %421 = vmatprep.mubr.f32.mxu0 0.0
    %422 = vmatmul.mubr.f32.gmra.mrb[0].mxu0 %v138
    %v423 = vpop.f32.mrb[0].mxu0
    %v424 = vadd.f32 %v92, %v423
    %v425 = vpop.f32.mrb[0].mxu0
    %426 = vmatprep.mubr.f32.mxu0 0.0
    %427 = vmatmul.mubr.f32.gmra.mrb[0].mxu0 %v141
    %v428 = vpop.f32.mrb[0].mxu0
    %v429 = vadd.f32 %v92, %v428
    %v430 = vpop.f32.mrb[0].mxu0
    %431 = vmatprep.mubr.f32.mxu0 0.0
    %432 = vmatmul.mubr.f32.gmra.mrb[0].mxu0 %v144
    %v433 = vpop.f32.mrb[0].mxu0
    %v434 = vadd.f32 %v92, %v433
    %v435 = vpop.f32.mrb[0].mxu0
    %436 = vmatprep.mubr.f32.mxu0 0.0
    %437 = vmatmul.mubr.f32.gmra.mrb[0].mxu0 %v147
    %v438 = vpop.f32.mrb[0].mxu0
    %v439 = vadd.f32 %v92, %v438
    %v440 = vpop.f32.mrb[0].mxu0
    %441 = vmatprep.mubr.f32.mxu0 0.0
    %442 = vmatmul.mubr.f32.gmra.mrb[0].mxu0 %v150
    %v443 = vpop.f32.mrb[0].mxu0
    %v444 = vadd.f32 %v92, %v443
    %v445 = vpop.f32.mrb[0].mxu0
    %446 = vmatprep.mubr.f32.mxu0 0.0
    %447 = vmatmul.mubr.f32.gmra.mrb[0].mxu0 %v153
    %v448 = vpop.f32.mrb[0].mxu0
    %v449 = vadd.f32 %v92, %v448
    %v450 = vpop.f32.mrb[0].mxu0
    %451 = vmatprep.mubr.f32.mxu0 0.0
    %452 = vmatmul.mubr.f32.gmra.mrb[0].mxu0 %v156
    %v453 = vpop.f32.mrb[0].mxu0
    %v454 = vadd.f32 %v92, %v453
    %v455 = vpop.f32.mrb[0].mxu0
    %456 = vmatprep.mubr.f32.mxu0 0.0
    %457 = vmatmul.mubr.f32.gmra.mrb[0].mxu0 %v159
    %v458 = vpop.f32.mrb[0].mxu0
    %v459 = vadd.f32 %v92, %v458
    %v460 = vpop.f32.mrb[0].mxu0
    %461 = vmatprep.mubr.f32.mxu0 0.0
    %462 = vmatmul.mubr.f32.gmra.mrb[0].mxu0 %v162
    %v463 = vpop.f32.mrb[0].mxu0
    %v464 = vadd.f32 %v92, %v463
    %v465 = vpop.f32.mrb[0].mxu0
    %466 = vmatprep.mubr.f32.mxu0 0.0
    %467 = vmatmul.mubr.f32.gmra.mrb[0].mxu0 %v165
    %v468 = vpop.f32.mrb[0].mxu0
    %v469 = vadd.f32 %v92, %v468
    %v470 = vpop.f32.mrb[0].mxu0
    %471 = vmatprep.mubr.f32.mxu0 0.0
    %472 = vmatmul.mubr.f32.gmra.mrb[0].mxu0 %v168
    %v473 = vpop.f32.mrb[0].mxu0
    %v474 = vadd.f32 %v92, %v473
    %v475 = vpop.f32.mrb[0].mxu0
    %476 = vmatprep.mubr.f32.mxu0 0.0
    %477 = vmatmul.mubr.f32.gmra.mrb[0].mxu0 %v171
    %v478 = vpop.f32.mrb[0].mxu0
    %v479 = vadd.f32 %v92, %v478
    %v480 = vpop.f32.mrb[0].mxu0
    %481 = vmatprep.mubr.f32.mxu0 0.0
    %482 = vmatmul.mubr.f32.gmra.mrb[0].mxu0 %v174
    %v483 = vpop.f32.mrb[0].mxu0
    %v484 = vadd.f32 %v92, %v483
    %v485 = vpop.f32.mrb[0].mxu0
    %486 = vmatprep.mubr.f32.mxu0 0.0
    %487 = vmatmul.mubr.f32.gmra.mrb[0].mxu0 %v177
    %v488 = vpop.f32.mrb[0].mxu0
    %v489 = vadd.f32 %v92, %v488
    %v490 = vpop.f32.mrb[0].mxu0
    %491 = vmatprep.mubr.f32.mxu0 0.0
    %492 = vmatmul.mubr.f32.gmra.mrb[0].mxu0 %v180
    %v493 = vpop.f32.mrb[0].mxu0
    %v494 = vadd.f32 %v92, %v493
    %v495 = vpop.f32.mrb[0].mxu0
    %496 = vmatprep.mubr.f32.mxu0 0.0
    %497 = vmatmul.mubr.f32.gmra.mrb[0].mxu0 %v183
    %v498 = vpop.f32.mrb[0].mxu0
    %v499 = vadd.f32 %v92, %v498
    %v500 = vpop.f32.mrb[0].mxu0
    %501 = vmatprep.mubr.f32.mxu0 0.0
    %502 = vmatmul.mubr.f32.gmra.mrb[0].mxu0 %v186
    %v503 = vpop.f32.mrb[0].mxu0
    %v504 = vadd.f32 %v92, %v503
    %v505 = vpop.f32.mrb[0].mxu0
    %506 = vmatprep.mubr.f32.mxu0 0.0
    %507 = vmatmul.mubr.f32.gmra.mrb[0].mxu0 %v189
    %v508 = vpop.f32.mrb[0].mxu0
    %v509 = vadd.f32 %v92, %v508
    %v510 = vpop.f32.mrb[0].mxu0
    %511 = vmatprep.mubr.f32.mxu0 0.0
    %512 = vmatmul.mubr.f32.gmra.mrb[0].mxu0 %v192
    %v513 = vpop.f32.mrb[0].mxu0
    %v514 = vadd.f32 %v92, %v513
    %v515 = vpop.f32.mrb[0].mxu0
    %516 = vmatprep.mubr.f32.mxu0 0.0
    %517 = vmatmul.mubr.f32.gmra.mrb[0].mxu0 %v195
    %v518 = vpop.f32.mrb[0].mxu0
    %v519 = vadd.f32 %v92, %v518
    %v520 = vpop.f32.mrb[0].mxu0
    %521 = vmatprep.mubr.f32.mxu0 0.0
    %522 = vmatmul.mubr.f32.gmra.mrb[0].mxu0 %v198
    %v523 = vpop.f32.mrb[0].mxu0
    %v524 = vadd.f32 %v92, %v523
    %v525 = vpop.f32.mrb[0].mxu0
    %526 = vmatprep.mubr.f32.mxu0 0.0
    %527 = vmatmul.mubr.f32.gmra.mrb[0].mxu0 %v201
    %v528 = vpop.f32.mrb[0].mxu0
    %v529 = vadd.f32 %v92, %v528
    %v530 = vpop.f32.mrb[0].mxu0
    %531 = vmatprep.mubr.f32.mxu0 0.0
    %532 = vmatmul.mubr.f32.gmra.mrb[0].mxu0 %v204
    %v533 = vpop.f32.mrb[0].mxu0
    %v534 = vadd.f32 %v92, %v533
    %v535 = vpop.f32.mrb[0].mxu0
    %536 = vmatprep.mubr.f32.mxu0 0.0
    %537 = vmatmul.mubr.f32.gmra.mrb[0].mxu0 %v207
    %v538 = vpop.f32.mrb[0].mxu0
    %v539 = vadd.f32 %v92, %v538
    %v540 = vpop.f32.mrb[0].mxu0
    %541 = vmatprep.mubr.f32.mxu0 0.0
    %542 = vmatmul.mubr.f32.gmra.mrb[0].mxu0 %v210
    %v543 = vpop.f32.mrb[0].mxu0
    %v544 = vadd.f32 %v92, %v543
    %v545 = vpop.f32.mrb[0].mxu0
    %546 = vmatprep.mubr.f32.mxu0 0.0
    %547 = vmatmul.mubr.f32.gmra.mrb[0].mxu0 %v213
    %v548 = vpop.f32.mrb[0].mxu0
    %v549 = vadd.f32 %v92, %v548
    %v550 = vpop.f32.mrb[0].mxu0
    %551 = vmatprep.mubr.f32.mxu0 0.0
    %552 = vmatmul.mubr.f32.gmra.mrb[0].mxu0 %v216
    %v553 = vpop.f32.mrb[0].mxu0
    %v554 = vadd.f32 %v92, %v553
    %v555 = vpop.f32.mrb[0].mxu0
    %556 = vmatprep.mubr.f32.mxu0 0.0
    %557 = vmatmul.mubr.f32.gmra.mrb[0].mxu0 %v219
    %v558 = vpop.f32.mrb[0].mxu0
    %v559 = vadd.f32 %v92, %v558
    %v560 = vpop.f32.mrb[0].mxu0
    %561 = vmatprep.mubr.f32.mxu0 0.0
    %562 = vmatmul.mubr.f32.gmra.mrb[0].mxu0 %v222
    %v563 = vpop.f32.mrb[0].mxu0
    %v564 = vadd.f32 %v92, %v563
    %v565 = vpop.f32.mrb[0].mxu0
    %566 = vmatprep.mubr.f32.mxu0 0.0
    %567 = vmatmul.mubr.f32.gmra.mrb[0].mxu0 %v225
    %v568 = vpop.f32.mrb[0].mxu0
    %v569 = vadd.f32 %v92, %v568
    %v570 = vpop.f32.mrb[0].mxu0
    %571 = vmatprep.mubr.f32.mxu0 0.0
    %572 = vmatmul.mubr.f32.gmra.mrb[0].mxu0 %v228
    %v573 = vpop.f32.mrb[0].mxu0
    %v574 = vadd.f32 %v92, %v573
    %v575 = vpop.f32.mrb[0].mxu0
    %576 = vmatprep.mubr.f32.mxu0 0.0
    %577 = vmatmul.mubr.f32.gmra.mrb[0].mxu0 %v231
    %v578 = vpop.f32.mrb[0].mxu0
    %v579 = vadd.f32 %v92, %v578
    %v580 = vpop.f32.mrb[0].mxu0
    %581 = vmatprep.mubr.f32.mxu0 0.0
    %582 = vmatmul.mubr.f32.gmra.mrb[0].mxu0 %v234
    %v583 = vpop.f32.mrb[0].mxu0
    %v584 = vadd.f32 %v92, %v583
    %v585 = vpop.f32.mrb[0].mxu0
    %586 = vmatprep.mubr.f32.mxu0 0.0
    %587 = vmatmul.mubr.f32.gmra.mrb[0].mxu0 %v237
    %v588 = vpop.f32.mrb[0].mxu0
    %v589 = vadd.f32 %v92, %v588
    %v590 = vpop.f32.mrb[0].mxu0
    %591 = vmatprep.mubr.f32.mxu0 0.0
    %592 = vmatmul.mubr.f32.gmra.mrb[0].mxu0 %v240
    %v593 = vpop.f32.mrb[0].mxu0
    %v594 = vadd.f32 %v92, %v593
    %v595 = vpop.f32.mrb[0].mxu0
    %596 = vmatprep.mubr.f32.mxu0 0.0
    %597 = vmatmul.mubr.f32.gmra.mrb[0].mxu0 %v243
    %v598 = vpop.f32.mrb[0].mxu0
    %v599 = vadd.f32 %v92, %v598
    %v600 = vpop.f32.mrb[0].mxu0
    %601 = vmatprep.mubr.f32.mxu0 0.0
    %602 = vmatmul.mubr.f32.gmra.mrb[0].mxu0 %v246
    %v603 = vpop.f32.mrb[0].mxu0
    %v604 = vadd.f32 %v92, %v603
    %v605 = vpop.f32.mrb[0].mxu0
    %606 = vmatprep.mubr.f32.mxu0 0.0
    %607 = vmatmul.mubr.f32.gmra.mrb[0].mxu0 %v249
    %v608 = vpop.f32.mrb[0].mxu0
    %v609 = vadd.f32 %v92, %v608
    %v610 = vpop.f32.mrb[0].mxu0
    %611 = vmatprep.mubr.f32.mxu0 0.0
    %612 = vmatmul.mubr.f32.gmra.mrb[0].mxu0 %v252
    %v613 = vpop.f32.mrb[0].mxu0
    %v614 = vadd.f32 %v92, %v613
    %v615 = vpop.f32.mrb[0].mxu0
    %616 = vmatprep.mubr.f32.mxu0 0.0
    %617 = vmatmul.mubr.f32.gmra.mrb[0].mxu0 %v255
    %v618 = vpop.f32.mrb[0].mxu0
    %v619 = vadd.f32 %v92, %v618
    %v620 = vpop.f32.mrb[0].mxu0
    %621 = vmatprep.mubr.f32.mxu0 0.0
    %622 = vmatmul.mubr.f32.gmra.mrb[0].mxu0 %v258
    %v623 = vpop.f32.mrb[0].mxu0
    %v624 = vadd.f32 %v92, %v623
    %v625 = vpop.f32.mrb[0].mxu0
    %626 = vmatprep.mubr.f32.mxu0 0.0
    %627 = vmatmul.mubr.f32.gmra.mrb[0].mxu0 %v261
    %v628 = vpop.f32.mrb[0].mxu0
    %v629 = vadd.f32 %v92, %v628
    %v630 = vpop.f32.mrb[0].mxu0
    %631 = vmatprep.mubr.f32.mxu0 0.0
    %632 = vmatmul.mubr.f32.gmra.mrb[0].mxu0 %v264
    %v633 = vpop.f32.mrb[0].mxu0
    %v634 = vadd.f32 %v92, %v633
    %v635 = vpop.f32.mrb[0].mxu0
    %636 = vmatprep.mubr.f32.mxu0 0.0
    %637 = vmatmul.mubr.f32.gmra.mrb[0].mxu0 %v267
    %v638 = vpop.f32.mrb[0].mxu0
    %v639 = vadd.f32 %v92, %v638
    %v640 = vpop.f32.mrb[0].mxu0
    %641 = vmatprep.mubr.f32.mxu0 0.0
    %642 = vmatmul.mubr.f32.gmra.mrb[0].mxu0 %v270
    %v643 = vpop.f32.mrb[0].mxu0
    %v644 = vadd.f32 %v92, %v643
    %v645 = vpop.f32.mrb[0].mxu0
    %646 = vmatprep.mubr.f32.mxu0 0.0
    %647 = vmatmul.mubr.f32.gmra.mrb[0].mxu0 %v273
    %v648 = vpop.f32.mrb[0].mxu0
    %v649 = vadd.f32 %v92, %v648
    %v650 = vpop.f32.mrb[0].mxu0
    %651 = vmatprep.mubr.f32.mxu0 0.0
    %652 = vmatmul.mubr.f32.gmra.mrb[0].mxu0 %v276
    %v653 = vpop.f32.mrb[0].mxu0
    %v654 = vadd.f32 %v92, %v653
    %v655 = vpop.f32.mrb[0].mxu0
    %656 = vmatprep.mubr.f32.mxu0 0.0
    %657 = vmatmul.mubr.f32.gmra.mrb[0].mxu0 %v279
    %v658 = vpop.f32.mrb[0].mxu0
    %v659 = vadd.f32 %v92, %v658
    %v660 = vpop.f32.mrb[0].mxu0
    %661 = vmatprep.mubr.f32.mxu0 0.0
    %662 = vmatmul.mubr.f32.gmra.mrb[0].mxu0 %v282
    %v663 = vpop.f32.mrb[0].mxu0
    %v664 = vadd.f32 %v92, %v663
    %v665 = vpop.f32.mrb[0].mxu0
    %666 = vmatprep.mubr.f32.mxu0 0.0
    %667 = vmatmul.mubr.f32.gmra.mrb[0].mxu0 %v285
    %v668 = vpop.f32.mrb[0].mxu0
    %v669 = vadd.f32 %v92, %v668
    %v670 = vpop.f32.mrb[0].mxu0
    %671 = vdwg.mxu0
    %v672 = vmax.f32 %v354, 0.0
    %v673 = vmax.f32 %v359, 0.0
    %v674 = vmax.f32 %v364, 0.0
    %v675 = vmax.f32 %v369, 0.0
    %v676 = vmax.f32 %v374, 0.0
    %v677 = vmax.f32 %v379, 0.0
    %v678 = vmax.f32 %v384, 0.0
    %v679 = vmax.f32 %v389, 0.0
    %v680 = vmax.f32 %v394, 0.0
    %v681 = vmax.f32 %v399, 0.0
    %v682 = vmax.f32 %v404, 0.0
    %v683 = vmax.f32 %v409, 0.0
    %v684 = vmax.f32 %v414, 0.0
    %v685 = vmax.f32 %v419, 0.0
    %v686 = vmax.f32 %v424, 0.0
    %v687 = vmax.f32 %v429, 0.0
    %v688 = vmax.f32 %v434, 0.0
    %v689 = vmax.f32 %v439, 0.0
    %v690 = vmax.f32 %v444, 0.0
    %v691 = vmax.f32 %v449, 0.0
    %v692 = vmax.f32 %v454, 0.0
    %v693 = vmax.f32 %v459, 0.0
    %v694 = vmax.f32 %v464, 0.0
    %v695 = vmax.f32 %v469, 0.0
    %v696 = vmax.f32 %v474, 0.0
    %v697 = vmax.f32 %v479, 0.0
    %v698 = vmax.f32 %v484, 0.0
    %v699 = vmax.f32 %v489, 0.0
    %v700 = vmax.f32 %v494, 0.0
    %v701 = vmax.f32 %v499, 0.0
    %v702 = vmax.f32 %v504, 0.0
    %v703 = vmax.f32 %v509, 0.0
    %v704 = vmax.f32 %v514, 0.0
    %v705 = vmax.f32 %v519, 0.0
    %v706 = vmax.f32 %v524, 0.0
    %v707 = vmax.f32 %v529, 0.0
    %v708 = vmax.f32 %v534, 0.0
    %v709 = vmax.f32 %v539, 0.0
    %v710 = vmax.f32 %v544, 0.0
    %v711 = vmax.f32 %v549, 0.0
    %v712 = vmax.f32 %v554, 0.0
    %v713 = vmax.f32 %v559, 0.0
    %v714 = vmax.f32 %v564, 0.0
    %v715 = vmax.f32 %v569, 0.0
    %v716 = vmax.f32 %v574, 0.0
    %v717 = vmax.f32 %v579, 0.0
    %v718 = vmax.f32 %v584, 0.0
    %v719 = vmax.f32 %v589, 0.0
    %v720 = vmax.f32 %v594, 0.0
    %v721 = vmax.f32 %v599, 0.0
    %v722 = vmax.f32 %v604, 0.0
    %v723 = vmax.f32 %v609, 0.0
    %v724 = vmax.f32 %v614, 0.0
    %v725 = vmax.f32 %v619, 0.0
    %v726 = vmax.f32 %v624, 0.0
    %v727 = vmax.f32 %v629, 0.0
    %v728 = vmax.f32 %v634, 0.0
    %v729 = vmax.f32 %v639, 0.0
    %v730 = vmax.f32 %v644, 0.0
    %v731 = vmax.f32 %v649, 0.0
    %v732 = vmax.f32 %v654, 0.0
    %v733 = vmax.f32 %v659, 0.0
    %v734 = vmax.f32 %v664, 0.0
    %v735 = vmax.f32 %v669, 0.0
    %v736 = vld [vmem:[%s3] sm:$0xff]
    %v737 = vld [vmem:[%s3 + $0x8] sm:$0xff]
    %v738 = vld [vmem:[%s3 + $0x10] sm:$0xff]
    %v739 = vld [vmem:[%s3 + $0x18] sm:$0xff]
    %v740 = vld [vmem:[%s3 + $0x20] sm:$0xff]
    %v741 = vld [vmem:[%s3 + $0x28] sm:$0xff]
    %v742 = vld [vmem:[%s3 + $0x30] sm:$0xff]
    %v743 = vld [vmem:[%s3 + $0x38] sm:$0xff]
    %v744 = vld [vmem:[%s4] sm:$0x1]
    %v746 = vlaneseq
    %v747 = vshrl.u32 %v746, 7
    %v748 = vsub.s32 0, %v747
    %v749 = vrot.slane %v744, %v748
    %vm751 = vcmask 523264
    %v753 = vsel %vm751, %v672, 0
    %v756 = vsel %vm751, %v673, 0
    %v759 = vsel %vm751, %v674, 0
    %v762 = vsel %vm751, %v675, 0
    %v765 = vsel %vm751, %v676, 0
    %v768 = vsel %vm751, %v677, 0
    %v771 = vsel %vm751, %v678, 0
    %v774 = vsel %vm751, %v679, 0
    %v777 = vsel %vm751, %v680, 0
    %v780 = vsel %vm751, %v681, 0
    %v783 = vsel %vm751, %v682, 0
    %v786 = vsel %vm751, %v683, 0
    %v789 = vsel %vm751, %v684, 0
    %v792 = vsel %vm751, %v685, 0
    %v795 = vsel %vm751, %v686, 0
    %v798 = vsel %vm751, %v687, 0
    %v801 = vsel %vm751, %v688, 0
    %v804 = vsel %vm751, %v689, 0
    %v807 = vsel %vm751, %v690, 0
    %v810 = vsel %vm751, %v691, 0
    %v813 = vsel %vm751, %v692, 0
    %v816 = vsel %vm751, %v693, 0
    %v819 = vsel %vm751, %v694, 0
    %v822 = vsel %vm751, %v695, 0
    %v825 = vsel %vm751, %v696, 0
    %v828 = vsel %vm751, %v697, 0
    %v831 = vsel %vm751, %v698, 0
    %v834 = vsel %vm751, %v699, 0
    %v837 = vsel %vm751, %v700, 0
    %v840 = vsel %vm751, %v701, 0
    %v843 = vsel %vm751, %v702, 0
    %v846 = vsel %vm751, %v703, 0
    %v849 = vsel %vm751, %v704, 0
    %v852 = vsel %vm751, %v705, 0
    %v855 = vsel %vm751, %v706, 0
    %v858 = vsel %vm751, %v707, 0
    %v861 = vsel %vm751, %v708, 0
    %v864 = vsel %vm751, %v709, 0
    %v867 = vsel %vm751, %v710, 0
    %v870 = vsel %vm751, %v711, 0
    %v873 = vsel %vm751, %v712, 0
    %v876 = vsel %vm751, %v713, 0
    %v879 = vsel %vm751, %v714, 0
    %v882 = vsel %vm751, %v715, 0
    %v885 = vsel %vm751, %v716, 0
    %v888 = vsel %vm751, %v717, 0
    %v891 = vsel %vm751, %v718, 0
    %v894 = vsel %vm751, %v719, 0
    %v897 = vsel %vm751, %v720, 0
    %v900 = vsel %vm751, %v721, 0
    %v903 = vsel %vm751, %v722, 0
    %v906 = vsel %vm751, %v723, 0
    %v909 = vsel %vm751, %v724, 0
    %v912 = vsel %vm751, %v725, 0
    %v915 = vsel %vm751, %v726, 0
    %v918 = vsel %vm751, %v727, 0
    %v921 = vsel %vm751, %v728, 0
    %v924 = vsel %vm751, %v729, 0
    %v927 = vsel %vm751, %v730, 0
    %v930 = vsel %vm751, %v731, 0
    %v933 = vsel %vm751, %v732, 0
    %v936 = vsel %vm751, %v733, 0
    %v939 = vsel %vm751, %v734, 0
    %v942 = vsel %vm751, %v735, 0
    %944 = vmatprep.subr.mxu0 0.0
    %945 = vmatpush1.msra.mxu0 %v736
    %946 = vmatprep.subr.mxu0 0.0
    %947 = vmatpush1.msra.mxu0 %v737
    %948 = vmatprep.subr.mxu0 0.0
    %949 = vmatpush1.msra.mxu0 %v738
    %950 = vmatprep.subr.mxu0 0.0
    %951 = vmatpush1.msra.mxu0 %v739
    %952 = vmatprep.subr.mxu0 0.0
    %953 = vmatpush1.msra.mxu0 %v740
    %954 = vmatprep.subr.mxu0 0.0
    %955 = vmatpush1.msra.mxu0 %v741
    %956 = vmatprep.subr.mxu0 0.0
    %957 = vmatpush1.msra.mxu0 %v742
    %958 = vmatprep.subr.mxu0 0.0
    %959 = vmatpush1.msra.mxu0 %v743
    %960 = vmatprep.subr.mxu0 0.0
    %961 = vmatpush1.msra.mxu0 0.0
    %962 = vmatprep.subr.mxu0 0.0
    %963 = vmatpush1.msra.mxu0 0.0
    %964 = vmatprep.subr.mxu0 0.0
    %965 = vmatpush1.msra.mxu0 0.0
    %966 = vmatprep.subr.mxu0 0.0
    %967 = vmatpush1.msra.mxu0 0.0
    %968 = vmatprep.subr.mxu0 0.0
    %969 = vmatpush1.msra.mxu0 0.0
    %970 = vmatprep.subr.mxu0 0.0
    %971 = vmatpush1.msra.mxu0 0.0
    %972 = vmatprep.subr.mxu0 0.0
    %973 = vmatpush1.msra.mxu0 0.0
    %974 = vmatprep.subr.mxu0 0.0
    %975 = vmatpush1.msra.mxu0 0.0
    %976 = vmatprep.subr.mxu0 0.0
    %977 = vmatpush1.msra.mxu0 0.0
    %978 = vmatprep.subr.mxu0 0.0
    %979 = vmatpush1.msra.mxu0 0.0
    %980 = vmatprep.subr.mxu0 0.0
    %981 = vmatpush1.msra.mxu0 0.0
    %982 = vmatprep.subr.mxu0 0.0
    %983 = vmatpush1.msra.mxu0 0.0
    %984 = vmatprep.subr.mxu0 0.0
    %985 = vmatpush1.msra.mxu0 0.0
    %986 = vmatprep.subr.mxu0 0.0
    %987 = vmatpush1.msra.mxu0 0.0
    %988 = vmatprep.subr.mxu0 0.0
    %989 = vmatpush1.msra.mxu0 0.0
    %990 = vmatprep.subr.mxu0 0.0
    %991 = vmatpush1.msra.mxu0 0.0
    %992 = vmatprep.subr.mxu0 0.0
    %993 = vmatpush1.msra.mxu0 0.0
    %994 = vmatprep.subr.mxu0 0.0
    %995 = vmatpush1.msra.mxu0 0.0
    %996 = vmatprep.subr.mxu0 0.0
    %997 = vmatpush1.msra.mxu0 0.0
    %998 = vmatprep.subr.mxu0 0.0
    %999 = vmatpush1.msra.mxu0 0.0
    %1000 = vmatprep.subr.mxu0 0.0
    %1001 = vmatpush1.msra.mxu0 0.0
    %1002 = vmatprep.subr.mxu0 0.0
    %1003 = vmatpush1.msra.mxu0 0.0
    %1004 = vmatprep.subr.mxu0 0.0
    %1005 = vmatpush1.msra.mxu0 0.0
    %1006 = vmatprep.subr.mxu0 0.0
    %1007 = vmatpush1.msra.mxu0 0.0
    %1008 = vmatprep.mubr.f32.mxu0 0.0
    %1009 = vmatmul.mubr.f32.gmra.mrb[0].mxu0 %v753
    %v1010 = vpop.f32.mrb[0].mxu0
    %v1011 = vadd.f32 %v749, %v1010
    %v1012 = vpop.f32.mrb[0].mxu0
    %1013 = vmatprep.mubr.f32.mxu0 0.0
    %1014 = vmatmul.mubr.f32.gmra.mrb[0].mxu0 %v756
    %v1015 = vpop.f32.mrb[0].mxu0
    %v1016 = vadd.f32 %v749, %v1015
    %v1017 = vpop.f32.mrb[0].mxu0
    %1018 = vmatprep.mubr.f32.mxu0 0.0
    %1019 = vmatmul.mubr.f32.gmra.mrb[0].mxu0 %v759
    %v1020 = vpop.f32.mrb[0].mxu0
    %v1021 = vadd.f32 %v749, %v1020
    %v1022 = vpop.f32.mrb[0].mxu0
    %1023 = vmatprep.mubr.f32.mxu0 0.0
    %1024 = vmatmul.mubr.f32.gmra.mrb[0].mxu0 %v762
    %v1025 = vpop.f32.mrb[0].mxu0
    %v1026 = vadd.f32 %v749, %v1025
    %v1027 = vpop.f32.mrb[0].mxu0
    %1028 = vmatprep.mubr.f32.mxu0 0.0
    %1029 = vmatmul.mubr.f32.gmra.mrb[0].mxu0 %v765
    %v1030 = vpop.f32.mrb[0].mxu0
    %v1031 = vadd.f32 %v749, %v1030
    %v1032 = vpop.f32.mrb[0].mxu0
    %1033 = vmatprep.mubr.f32.mxu0 0.0
    %1034 = vmatmul.mubr.f32.gmra.mrb[0].mxu0 %v768
    %v1035 = vpop.f32.mrb[0].mxu0
    %v1036 = vadd.f32 %v749, %v1035
    %v1037 = vpop.f32.mrb[0].mxu0
    %1038 = vmatprep.mubr.f32.mxu0 0.0
    %1039 = vmatmul.mubr.f32.gmra.mrb[0].mxu0 %v771
    %v1040 = vpop.f32.mrb[0].mxu0
    %v1041 = vadd.f32 %v749, %v1040
    %v1042 = vpop.f32.mrb[0].mxu0
    %1043 = vmatprep.mubr.f32.mxu0 0.0
    %1044 = vmatmul.mubr.f32.gmra.mrb[0].mxu0 %v774
    %v1045 = vpop.f32.mrb[0].mxu0
    %v1046 = vadd.f32 %v749, %v1045
    %v1047 = vpop.f32.mrb[0].mxu0
    %1048 = vmatprep.mubr.f32.mxu0 0.0
    %1049 = vmatmul.mubr.f32.gmra.mrb[0].mxu0 %v777
    %v1050 = vpop.f32.mrb[0].mxu0
    %v1051 = vadd.f32 %v749, %v1050
    %v1052 = vpop.f32.mrb[0].mxu0
    %1053 = vmatprep.mubr.f32.mxu0 0.0
    %1054 = vmatmul.mubr.f32.gmra.mrb[0].mxu0 %v780
    %v1055 = vpop.f32.mrb[0].mxu0
    %v1056 = vadd.f32 %v749, %v1055
    %v1057 = vpop.f32.mrb[0].mxu0
    %1058 = vmatprep.mubr.f32.mxu0 0.0
    %1059 = vmatmul.mubr.f32.gmra.mrb[0].mxu0 %v783
    %v1060 = vpop.f32.mrb[0].mxu0
    %v1061 = vadd.f32 %v749, %v1060
    %v1062 = vpop.f32.mrb[0].mxu0
    %1063 = vmatprep.mubr.f32.mxu0 0.0
    %1064 = vmatmul.mubr.f32.gmra.mrb[0].mxu0 %v786
    %v1065 = vpop.f32.mrb[0].mxu0
    %v1066 = vadd.f32 %v749, %v1065
    %v1067 = vpop.f32.mrb[0].mxu0
    %1068 = vmatprep.mubr.f32.mxu0 0.0
    %1069 = vmatmul.mubr.f32.gmra.mrb[0].mxu0 %v789
    %v1070 = vpop.f32.mrb[0].mxu0
    %v1071 = vadd.f32 %v749, %v1070
    %v1072 = vpop.f32.mrb[0].mxu0
    %1073 = vmatprep.mubr.f32.mxu0 0.0
    %1074 = vmatmul.mubr.f32.gmra.mrb[0].mxu0 %v792
    %v1075 = vpop.f32.mrb[0].mxu0
    %v1076 = vadd.f32 %v749, %v1075
    %v1077 = vpop.f32.mrb[0].mxu0
    %1078 = vmatprep.mubr.f32.mxu0 0.0
    %1079 = vmatmul.mubr.f32.gmra.mrb[0].mxu0 %v795
    %v1080 = vpop.f32.mrb[0].mxu0
    %v1081 = vadd.f32 %v749, %v1080
    %v1082 = vpop.f32.mrb[0].mxu0
    %1083 = vmatprep.mubr.f32.mxu0 0.0
    %1084 = vmatmul.mubr.f32.gmra.mrb[0].mxu0 %v798
    %v1085 = vpop.f32.mrb[0].mxu0
    %v1086 = vadd.f32 %v749, %v1085
    %v1087 = vpop.f32.mrb[0].mxu0
    %1088 = vmatprep.mubr.f32.mxu0 0.0
    %1089 = vmatmul.mubr.f32.gmra.mrb[0].mxu0 %v801
    %v1090 = vpop.f32.mrb[0].mxu0
    %v1091 = vadd.f32 %v749, %v1090
    %v1092 = vpop.f32.mrb[0].mxu0
    %1093 = vmatprep.mubr.f32.mxu0 0.0
    %1094 = vmatmul.mubr.f32.gmra.mrb[0].mxu0 %v804
    %v1095 = vpop.f32.mrb[0].mxu0
    %v1096 = vadd.f32 %v749, %v1095
    %v1097 = vpop.f32.mrb[0].mxu0
    %1098 = vmatprep.mubr.f32.mxu0 0.0
    %1099 = vmatmul.mubr.f32.gmra.mrb[0].mxu0 %v807
    %v1100 = vpop.f32.mrb[0].mxu0
    %v1101 = vadd.f32 %v749, %v1100
    %v1102 = vpop.f32.mrb[0].mxu0
    %1103 = vmatprep.mubr.f32.mxu0 0.0
    %1104 = vmatmul.mubr.f32.gmra.mrb[0].mxu0 %v810
    %v1105 = vpop.f32.mrb[0].mxu0
    %v1106 = vadd.f32 %v749, %v1105
    %v1107 = vpop.f32.mrb[0].mxu0
    %1108 = vmatprep.mubr.f32.mxu0 0.0
    %1109 = vmatmul.mubr.f32.gmra.mrb[0].mxu0 %v813
    %v1110 = vpop.f32.mrb[0].mxu0
    %v1111 = vadd.f32 %v749, %v1110
    %v1112 = vpop.f32.mrb[0].mxu0
    %1113 = vmatprep.mubr.f32.mxu0 0.0
    %1114 = vmatmul.mubr.f32.gmra.mrb[0].mxu0 %v816
    %v1115 = vpop.f32.mrb[0].mxu0
    %v1116 = vadd.f32 %v749, %v1115
    %v1117 = vpop.f32.mrb[0].mxu0
    %1118 = vmatprep.mubr.f32.mxu0 0.0
    %1119 = vmatmul.mubr.f32.gmra.mrb[0].mxu0 %v819
    %v1120 = vpop.f32.mrb[0].mxu0
    %v1121 = vadd.f32 %v749, %v1120
    %v1122 = vpop.f32.mrb[0].mxu0
    %1123 = vmatprep.mubr.f32.mxu0 0.0
    %1124 = vmatmul.mubr.f32.gmra.mrb[0].mxu0 %v822
    %v1125 = vpop.f32.mrb[0].mxu0
    %v1126 = vadd.f32 %v749, %v1125
    %v1127 = vpop.f32.mrb[0].mxu0
    %1128 = vmatprep.mubr.f32.mxu0 0.0
    %1129 = vmatmul.mubr.f32.gmra.mrb[0].mxu0 %v825
    %v1130 = vpop.f32.mrb[0].mxu0
    %v1131 = vadd.f32 %v749, %v1130
    %v1132 = vpop.f32.mrb[0].mxu0
    %1133 = vmatprep.mubr.f32.mxu0 0.0
    %1134 = vmatmul.mubr.f32.gmra.mrb[0].mxu0 %v828
    %v1135 = vpop.f32.mrb[0].mxu0
    %v1136 = vadd.f32 %v749, %v1135
    %v1137 = vpop.f32.mrb[0].mxu0
    %1138 = vmatprep.mubr.f32.mxu0 0.0
    %1139 = vmatmul.mubr.f32.gmra.mrb[0].mxu0 %v831
    %v1140 = vpop.f32.mrb[0].mxu0
    %v1141 = vadd.f32 %v749, %v1140
    %v1142 = vpop.f32.mrb[0].mxu0
    %1143 = vmatprep.mubr.f32.mxu0 0.0
    %1144 = vmatmul.mubr.f32.gmra.mrb[0].mxu0 %v834
    %v1145 = vpop.f32.mrb[0].mxu0
    %v1146 = vadd.f32 %v749, %v1145
    %v1147 = vpop.f32.mrb[0].mxu0
    %1148 = vmatprep.mubr.f32.mxu0 0.0
    %1149 = vmatmul.mubr.f32.gmra.mrb[0].mxu0 %v837
    %v1150 = vpop.f32.mrb[0].mxu0
    %v1151 = vadd.f32 %v749, %v1150
    %v1152 = vpop.f32.mrb[0].mxu0
    %1153 = vmatprep.mubr.f32.mxu0 0.0
    %1154 = vmatmul.mubr.f32.gmra.mrb[0].mxu0 %v840
    %v1155 = vpop.f32.mrb[0].mxu0
    %v1156 = vadd.f32 %v749, %v1155
    %v1157 = vpop.f32.mrb[0].mxu0
    %1158 = vmatprep.mubr.f32.mxu0 0.0
    %1159 = vmatmul.mubr.f32.gmra.mrb[0].mxu0 %v843
    %v1160 = vpop.f32.mrb[0].mxu0
    %v1161 = vadd.f32 %v749, %v1160
    %v1162 = vpop.f32.mrb[0].mxu0
    %1163 = vmatprep.mubr.f32.mxu0 0.0
    %1164 = vmatmul.mubr.f32.gmra.mrb[0].mxu0 %v846
    %v1165 = vpop.f32.mrb[0].mxu0
    %v1166 = vadd.f32 %v749, %v1165
    %v1167 = vpop.f32.mrb[0].mxu0
    %1168 = vmatprep.mubr.f32.mxu0 0.0
    %1169 = vmatmul.mubr.f32.gmra.mrb[0].mxu0 %v849
    %v1170 = vpop.f32.mrb[0].mxu0
    %v1171 = vadd.f32 %v749, %v1170
    %v1172 = vpop.f32.mrb[0].mxu0
    %1173 = vmatprep.mubr.f32.mxu0 0.0
    %1174 = vmatmul.mubr.f32.gmra.mrb[0].mxu0 %v852
    %v1175 = vpop.f32.mrb[0].mxu0
    %v1176 = vadd.f32 %v749, %v1175
    %v1177 = vpop.f32.mrb[0].mxu0
    %1178 = vmatprep.mubr.f32.mxu0 0.0
    %1179 = vmatmul.mubr.f32.gmra.mrb[0].mxu0 %v855
    %v1180 = vpop.f32.mrb[0].mxu0
    %v1181 = vadd.f32 %v749, %v1180
    %v1182 = vpop.f32.mrb[0].mxu0
    %1183 = vmatprep.mubr.f32.mxu0 0.0
    %1184 = vmatmul.mubr.f32.gmra.mrb[0].mxu0 %v858
    %v1185 = vpop.f32.mrb[0].mxu0
    %v1186 = vadd.f32 %v749, %v1185
    %v1187 = vpop.f32.mrb[0].mxu0
    %1188 = vmatprep.mubr.f32.mxu0 0.0
    %1189 = vmatmul.mubr.f32.gmra.mrb[0].mxu0 %v861
    %v1190 = vpop.f32.mrb[0].mxu0
    %v1191 = vadd.f32 %v749, %v1190
    %v1192 = vpop.f32.mrb[0].mxu0
    %1193 = vmatprep.mubr.f32.mxu0 0.0
    %1194 = vmatmul.mubr.f32.gmra.mrb[0].mxu0 %v864
    %v1195 = vpop.f32.mrb[0].mxu0
    %v1196 = vadd.f32 %v749, %v1195
    %v1197 = vpop.f32.mrb[0].mxu0
    %1198 = vmatprep.mubr.f32.mxu0 0.0
    %1199 = vmatmul.mubr.f32.gmra.mrb[0].mxu0 %v867
    %v1200 = vpop.f32.mrb[0].mxu0
    %v1201 = vadd.f32 %v749, %v1200
    %v1202 = vpop.f32.mrb[0].mxu0
    %1203 = vmatprep.mubr.f32.mxu0 0.0
    %1204 = vmatmul.mubr.f32.gmra.mrb[0].mxu0 %v870
    %v1205 = vpop.f32.mrb[0].mxu0
    %v1206 = vadd.f32 %v749, %v1205
    %v1207 = vpop.f32.mrb[0].mxu0
    %1208 = vmatprep.mubr.f32.mxu0 0.0
    %1209 = vmatmul.mubr.f32.gmra.mrb[0].mxu0 %v873
    %v1210 = vpop.f32.mrb[0].mxu0
    %v1211 = vadd.f32 %v749, %v1210
    %v1212 = vpop.f32.mrb[0].mxu0
    %1213 = vmatprep.mubr.f32.mxu0 0.0
    %1214 = vmatmul.mubr.f32.gmra.mrb[0].mxu0 %v876
    %v1215 = vpop.f32.mrb[0].mxu0
    %v1216 = vadd.f32 %v749, %v1215
    %v1217 = vpop.f32.mrb[0].mxu0
    %1218 = vmatprep.mubr.f32.mxu0 0.0
    %1219 = vmatmul.mubr.f32.gmra.mrb[0].mxu0 %v879
    %v1220 = vpop.f32.mrb[0].mxu0
    %v1221 = vadd.f32 %v749, %v1220
    %v1222 = vpop.f32.mrb[0].mxu0
    %1223 = vmatprep.mubr.f32.mxu0 0.0
    %1224 = vmatmul.mubr.f32.gmra.mrb[0].mxu0 %v882
    %v1225 = vpop.f32.mrb[0].mxu0
    %v1226 = vadd.f32 %v749, %v1225
    %v1227 = vpop.f32.mrb[0].mxu0
    %1228 = vmatprep.mubr.f32.mxu0 0.0
    %1229 = vmatmul.mubr.f32.gmra.mrb[0].mxu0 %v885
    %v1230 = vpop.f32.mrb[0].mxu0
    %v1231 = vadd.f32 %v749, %v1230
    %v1232 = vpop.f32.mrb[0].mxu0
    %1233 = vmatprep.mubr.f32.mxu0 0.0
    %1234 = vmatmul.mubr.f32.gmra.mrb[0].mxu0 %v888
    %v1235 = vpop.f32.mrb[0].mxu0
    %v1236 = vadd.f32 %v749, %v1235
    %v1237 = vpop.f32.mrb[0].mxu0
    %1238 = vmatprep.mubr.f32.mxu0 0.0
    %1239 = vmatmul.mubr.f32.gmra.mrb[0].mxu0 %v891
    %v1240 = vpop.f32.mrb[0].mxu0
    %v1241 = vadd.f32 %v749, %v1240
    %v1242 = vpop.f32.mrb[0].mxu0
    %1243 = vmatprep.mubr.f32.mxu0 0.0
    %1244 = vmatmul.mubr.f32.gmra.mrb[0].mxu0 %v894
    %v1245 = vpop.f32.mrb[0].mxu0
    %v1246 = vadd.f32 %v749, %v1245
    %v1247 = vpop.f32.mrb[0].mxu0
    %1248 = vmatprep.mubr.f32.mxu0 0.0
    %1249 = vmatmul.mubr.f32.gmra.mrb[0].mxu0 %v897
    %v1250 = vpop.f32.mrb[0].mxu0
    %v1251 = vadd.f32 %v749, %v1250
    %v1252 = vpop.f32.mrb[0].mxu0
    %1253 = vmatprep.mubr.f32.mxu0 0.0
    %1254 = vmatmul.mubr.f32.gmra.mrb[0].mxu0 %v900
    %v1255 = vpop.f32.mrb[0].mxu0
    %v1256 = vadd.f32 %v749, %v1255
    %v1257 = vpop.f32.mrb[0].mxu0
    %1258 = vmatprep.mubr.f32.mxu0 0.0
    %1259 = vmatmul.mubr.f32.gmra.mrb[0].mxu0 %v903
    %v1260 = vpop.f32.mrb[0].mxu0
    %v1261 = vadd.f32 %v749, %v1260
    %v1262 = vpop.f32.mrb[0].mxu0
    %1263 = vmatprep.mubr.f32.mxu0 0.0
    %1264 = vmatmul.mubr.f32.gmra.mrb[0].mxu0 %v906
    %v1265 = vpop.f32.mrb[0].mxu0
    %v1266 = vadd.f32 %v749, %v1265
    %v1267 = vpop.f32.mrb[0].mxu0
    %1268 = vmatprep.mubr.f32.mxu0 0.0
    %1269 = vmatmul.mubr.f32.gmra.mrb[0].mxu0 %v909
    %v1270 = vpop.f32.mrb[0].mxu0
    %v1271 = vadd.f32 %v749, %v1270
    %v1272 = vpop.f32.mrb[0].mxu0
    %1273 = vmatprep.mubr.f32.mxu0 0.0
    %1274 = vmatmul.mubr.f32.gmra.mrb[0].mxu0 %v912
    %v1275 = vpop.f32.mrb[0].mxu0
    %v1276 = vadd.f32 %v749, %v1275
    %v1277 = vpop.f32.mrb[0].mxu0
    %1278 = vmatprep.mubr.f32.mxu0 0.0
    %1279 = vmatmul.mubr.f32.gmra.mrb[0].mxu0 %v915
    %v1280 = vpop.f32.mrb[0].mxu0
    %v1281 = vadd.f32 %v749, %v1280
    %v1282 = vpop.f32.mrb[0].mxu0
    %1283 = vmatprep.mubr.f32.mxu0 0.0
    %1284 = vmatmul.mubr.f32.gmra.mrb[0].mxu0 %v918
    %v1285 = vpop.f32.mrb[0].mxu0
    %v1286 = vadd.f32 %v749, %v1285
    %v1287 = vpop.f32.mrb[0].mxu0
    %1288 = vmatprep.mubr.f32.mxu0 0.0
    %1289 = vmatmul.mubr.f32.gmra.mrb[0].mxu0 %v921
    %v1290 = vpop.f32.mrb[0].mxu0
    %v1291 = vadd.f32 %v749, %v1290
    %v1292 = vpop.f32.mrb[0].mxu0
    %1293 = vmatprep.mubr.f32.mxu0 0.0
    %1294 = vmatmul.mubr.f32.gmra.mrb[0].mxu0 %v924
    %v1295 = vpop.f32.mrb[0].mxu0
    %v1296 = vadd.f32 %v749, %v1295
    %v1297 = vpop.f32.mrb[0].mxu0
    %1298 = vmatprep.mubr.f32.mxu0 0.0
    %1299 = vmatmul.mubr.f32.gmra.mrb[0].mxu0 %v927
    %v1300 = vpop.f32.mrb[0].mxu0
    %v1301 = vadd.f32 %v749, %v1300
    %v1302 = vpop.f32.mrb[0].mxu0
    %1303 = vmatprep.mubr.f32.mxu0 0.0
    %1304 = vmatmul.mubr.f32.gmra.mrb[0].mxu0 %v930
    %v1305 = vpop.f32.mrb[0].mxu0
    %v1306 = vadd.f32 %v749, %v1305
    %v1307 = vpop.f32.mrb[0].mxu0
    %1308 = vmatprep.mubr.f32.mxu0 0.0
    %1309 = vmatmul.mubr.f32.gmra.mrb[0].mxu0 %v933
    %v1310 = vpop.f32.mrb[0].mxu0
    %v1311 = vadd.f32 %v749, %v1310
    %v1312 = vpop.f32.mrb[0].mxu0
    %1313 = vmatprep.mubr.f32.mxu0 0.0
    %1314 = vmatmul.mubr.f32.gmra.mrb[0].mxu0 %v936
    %v1315 = vpop.f32.mrb[0].mxu0
    %v1316 = vadd.f32 %v749, %v1315
    %v1317 = vpop.f32.mrb[0].mxu0
    %1318 = vmatprep.mubr.f32.mxu0 0.0
    %1319 = vmatmul.mubr.f32.gmra.mrb[0].mxu0 %v939
    %v1320 = vpop.f32.mrb[0].mxu0
    %v1321 = vadd.f32 %v749, %v1320
    %v1322 = vpop.f32.mrb[0].mxu0
    %1323 = vmatprep.mubr.f32.mxu0 0.0
    %1324 = vmatmul.mubr.f32.gmra.mrb[0].mxu0 %v942
    %v1325 = vpop.f32.mrb[0].mxu0
    %v1326 = vadd.f32 %v749, %v1325
    %v1327 = vpop.f32.mrb[0].mxu0
    %1328 = vdwg.mxu0
    %v1329 = vmax.f32 %v1011, -20.0
    %v1330 = vmax.f32 %v1016, -20.0
    %v1331 = vmax.f32 %v1021, -20.0
    %v1332 = vmax.f32 %v1026, -20.0
    %v1333 = vmax.f32 %v1031, -20.0
    %v1334 = vmax.f32 %v1036, -20.0
    %v1335 = vmax.f32 %v1041, -20.0
    %v1336 = vmax.f32 %v1046, -20.0
    %v1337 = vmax.f32 %v1051, -20.0
    %v1338 = vmax.f32 %v1056, -20.0
    %v1339 = vmax.f32 %v1061, -20.0
    %v1340 = vmax.f32 %v1066, -20.0
    %v1341 = vmax.f32 %v1071, -20.0
    %v1342 = vmax.f32 %v1076, -20.0
    %v1343 = vmax.f32 %v1081, -20.0
    %v1344 = vmax.f32 %v1086, -20.0
    %v1345 = vmax.f32 %v1091, -20.0
    %v1346 = vmax.f32 %v1096, -20.0
    %v1347 = vmax.f32 %v1101, -20.0
    %v1348 = vmax.f32 %v1106, -20.0
    %v1349 = vmax.f32 %v1111, -20.0
    %v1350 = vmax.f32 %v1116, -20.0
    %v1351 = vmax.f32 %v1121, -20.0
    %v1352 = vmax.f32 %v1126, -20.0
    %v1353 = vmax.f32 %v1131, -20.0
    %v1354 = vmax.f32 %v1136, -20.0
    %v1355 = vmax.f32 %v1141, -20.0
    %v1356 = vmax.f32 %v1146, -20.0
    %v1357 = vmax.f32 %v1151, -20.0
    %v1358 = vmax.f32 %v1156, -20.0
    %v1359 = vmax.f32 %v1161, -20.0
    %v1360 = vmax.f32 %v1166, -20.0
    %v1361 = vmax.f32 %v1171, -20.0
    %v1362 = vmax.f32 %v1176, -20.0
    %v1363 = vmax.f32 %v1181, -20.0
    %v1364 = vmax.f32 %v1186, -20.0
    %v1365 = vmax.f32 %v1191, -20.0
    %v1366 = vmax.f32 %v1196, -20.0
    %v1367 = vmax.f32 %v1201, -20.0
    %v1368 = vmax.f32 %v1206, -20.0
    %v1369 = vmax.f32 %v1211, -20.0
    %v1370 = vmax.f32 %v1216, -20.0
    %v1371 = vmax.f32 %v1221, -20.0
    %v1372 = vmax.f32 %v1226, -20.0
    %v1373 = vmax.f32 %v1231, -20.0
    %v1374 = vmax.f32 %v1236, -20.0
    %v1375 = vmax.f32 %v1241, -20.0
    %v1376 = vmax.f32 %v1246, -20.0
    %v1377 = vmax.f32 %v1251, -20.0
    %v1378 = vmax.f32 %v1256, -20.0
    %v1379 = vmax.f32 %v1261, -20.0
    %v1380 = vmax.f32 %v1266, -20.0
    %v1381 = vmax.f32 %v1271, -20.0
    %v1382 = vmax.f32 %v1276, -20.0
    %v1383 = vmax.f32 %v1281, -20.0
    %v1384 = vmax.f32 %v1286, -20.0
    %v1385 = vmax.f32 %v1291, -20.0
    %v1386 = vmax.f32 %v1296, -20.0
    %v1387 = vmax.f32 %v1301, -20.0
    %v1388 = vmax.f32 %v1306, -20.0
    %v1389 = vmax.f32 %v1311, -20.0
    %v1390 = vmax.f32 %v1316, -20.0
    %v1391 = vmax.f32 %v1321, -20.0
    %v1392 = vmax.f32 %v1326, -20.0
    %v1393 = vmin.f32 %v1329, 2.0
    %v1394 = vmin.f32 %v1330, 2.0
    %v1395 = vmin.f32 %v1331, 2.0
    %v1396 = vmin.f32 %v1332, 2.0
    %v1397 = vmin.f32 %v1333, 2.0
    %v1398 = vmin.f32 %v1334, 2.0
    %v1399 = vmin.f32 %v1335, 2.0
    %v1400 = vmin.f32 %v1336, 2.0
    %v1401 = vmin.f32 %v1337, 2.0
    %v1402 = vmin.f32 %v1338, 2.0
    %v1403 = vmin.f32 %v1339, 2.0
    %v1404 = vmin.f32 %v1340, 2.0
    %v1405 = vmin.f32 %v1341, 2.0
    %v1406 = vmin.f32 %v1342, 2.0
    %v1407 = vmin.f32 %v1343, 2.0
    %v1408 = vmin.f32 %v1344, 2.0
    %v1409 = vmin.f32 %v1345, 2.0
    %v1410 = vmin.f32 %v1346, 2.0
    %v1411 = vmin.f32 %v1347, 2.0
    %v1412 = vmin.f32 %v1348, 2.0
    %v1413 = vmin.f32 %v1349, 2.0
    %v1414 = vmin.f32 %v1350, 2.0
    %v1415 = vmin.f32 %v1351, 2.0
    %v1416 = vmin.f32 %v1352, 2.0
    %v1417 = vmin.f32 %v1353, 2.0
    %v1418 = vmin.f32 %v1354, 2.0
    %v1419 = vmin.f32 %v1355, 2.0
    %v1420 = vmin.f32 %v1356, 2.0
    %v1421 = vmin.f32 %v1357, 2.0
    %v1422 = vmin.f32 %v1358, 2.0
    %v1423 = vmin.f32 %v1359, 2.0
    %v1424 = vmin.f32 %v1360, 2.0
    %v1425 = vmin.f32 %v1361, 2.0
    %v1426 = vmin.f32 %v1362, 2.0
    %v1427 = vmin.f32 %v1363, 2.0
    %v1428 = vmin.f32 %v1364, 2.0
    %v1429 = vmin.f32 %v1365, 2.0
    %v1430 = vmin.f32 %v1366, 2.0
    %v1431 = vmin.f32 %v1367, 2.0
    %v1432 = vmin.f32 %v1368, 2.0
    %v1433 = vmin.f32 %v1369, 2.0
    %v1434 = vmin.f32 %v1370, 2.0
    %v1435 = vmin.f32 %v1371, 2.0
    %v1436 = vmin.f32 %v1372, 2.0
    %v1437 = vmin.f32 %v1373, 2.0
    %v1438 = vmin.f32 %v1374, 2.0
    %v1439 = vmin.f32 %v1375, 2.0
    %v1440 = vmin.f32 %v1376, 2.0
    %v1441 = vmin.f32 %v1377, 2.0
    %v1442 = vmin.f32 %v1378, 2.0
    %v1443 = vmin.f32 %v1379, 2.0
    %v1444 = vmin.f32 %v1380, 2.0
    %v1445 = vmin.f32 %v1381, 2.0
    %v1446 = vmin.f32 %v1382, 2.0
    %v1447 = vmin.f32 %v1383, 2.0
    %v1448 = vmin.f32 %v1384, 2.0
    %v1449 = vmin.f32 %v1385, 2.0
    %v1450 = vmin.f32 %v1386, 2.0
    %v1451 = vmin.f32 %v1387, 2.0
    %v1452 = vmin.f32 %v1388, 2.0
    %v1453 = vmin.f32 %v1389, 2.0
    %v1454 = vmin.f32 %v1390, 2.0
    %v1455 = vmin.f32 %v1391, 2.0
    %v1456 = vmin.f32 %v1392, 2.0
    %v1457 = vmul.f32 %v1393, 1.442695
    %v1458 = vpow.pop %v1457
    %v1459 = vmul.f32 %v1394, 1.442695
    %v1460 = vpow.pop %v1459
    %v1461 = vmul.f32 %v1395, 1.442695
    %v1462 = vpow.pop %v1461
    %v1463 = vmul.f32 %v1396, 1.442695
    %v1464 = vpow.pop %v1463
    %v1465 = vmul.f32 %v1397, 1.442695
    %v1466 = vpow.pop %v1465
    %v1467 = vmul.f32 %v1398, 1.442695
    %v1468 = vpow.pop %v1467
    %v1469 = vmul.f32 %v1399, 1.442695
    %v1470 = vpow.pop %v1469
    %v1471 = vmul.f32 %v1400, 1.442695
    %v1472 = vpow.pop %v1471
    %v1473 = vmul.f32 %v1401, 1.442695
    %v1474 = vpow.pop %v1473
    %v1475 = vmul.f32 %v1402, 1.442695
    %v1476 = vpow.pop %v1475
    %v1477 = vmul.f32 %v1403, 1.442695
    %v1478 = vpow.pop %v1477
    %v1479 = vmul.f32 %v1404, 1.442695
    %v1480 = vpow.pop %v1479
    %v1481 = vmul.f32 %v1405, 1.442695
    %v1482 = vpow.pop %v1481
    %v1483 = vmul.f32 %v1406, 1.442695
    %v1484 = vpow.pop %v1483
    %v1485 = vmul.f32 %v1407, 1.442695
    %v1486 = vpow.pop %v1485
    %v1487 = vmul.f32 %v1408, 1.442695
    %v1488 = vpow.pop %v1487
    %v1489 = vmul.f32 %v1409, 1.442695
    %v1490 = vpow.pop %v1489
    %v1491 = vmul.f32 %v1410, 1.442695
    %v1492 = vpow.pop %v1491
    %v1493 = vmul.f32 %v1411, 1.442695
    %v1494 = vpow.pop %v1493
    %v1495 = vmul.f32 %v1412, 1.442695
    %v1496 = vpow.pop %v1495
    %v1497 = vmul.f32 %v1413, 1.442695
    %v1498 = vpow.pop %v1497
    %v1499 = vmul.f32 %v1414, 1.442695
    %v1500 = vpow.pop %v1499
    %v1501 = vmul.f32 %v1415, 1.442695
    %v1502 = vpow.pop %v1501
    %v1503 = vmul.f32 %v1416, 1.442695
    %v1504 = vpow.pop %v1503
    %v1505 = vmul.f32 %v1417, 1.442695
    %v1506 = vpow.pop %v1505
    %v1507 = vmul.f32 %v1418, 1.442695
    %v1508 = vpow.pop %v1507
    %v1509 = vmul.f32 %v1419, 1.442695
    %v1510 = vpow.pop %v1509
    %v1511 = vmul.f32 %v1420, 1.442695
    %v1512 = vpow.pop %v1511
    %v1513 = vmul.f32 %v1421, 1.442695
    %v1514 = vpow.pop %v1513
    %v1515 = vmul.f32 %v1422, 1.442695
    %v1516 = vpow.pop %v1515
    %v1517 = vmul.f32 %v1423, 1.442695
    %v1518 = vpow.pop %v1517
    %v1519 = vmul.f32 %v1424, 1.442695
    %v1520 = vpow.pop %v1519
    %v1521 = vmul.f32 %v1425, 1.442695
    %v1522 = vpow.pop %v1521
    %v1523 = vmul.f32 %v1426, 1.442695
    %v1524 = vpow.pop %v1523
    %v1525 = vmul.f32 %v1427, 1.442695
    %v1526 = vpow.pop %v1525
    %v1527 = vmul.f32 %v1428, 1.442695
    %v1528 = vpow.pop %v1527
    %v1529 = vmul.f32 %v1429, 1.442695
    %v1530 = vpow.pop %v1529
    %v1531 = vmul.f32 %v1430, 1.442695
    %v1532 = vpow.pop %v1531
    %v1533 = vmul.f32 %v1431, 1.442695
    %v1534 = vpow.pop %v1533
    %v1535 = vmul.f32 %v1432, 1.442695
    %v1536 = vpow.pop %v1535
    %v1537 = vmul.f32 %v1433, 1.442695
    %v1538 = vpow.pop %v1537
    %v1539 = vmul.f32 %v1434, 1.442695
    %v1540 = vpow.pop %v1539
    %v1541 = vmul.f32 %v1435, 1.442695
    %v1542 = vpow.pop %v1541
    %v1543 = vmul.f32 %v1436, 1.442695
    %v1544 = vpow.pop %v1543
    %v1545 = vmul.f32 %v1437, 1.442695
    %v1546 = vpow.pop %v1545
    %v1547 = vmul.f32 %v1438, 1.442695
    %v1548 = vpow.pop %v1547
    %v1549 = vmul.f32 %v1439, 1.442695
    %v1550 = vpow.pop %v1549
    %v1551 = vmul.f32 %v1440, 1.442695
    %v1552 = vpow.pop %v1551
    %v1553 = vmul.f32 %v1441, 1.442695
    %v1554 = vpow.pop %v1553
    %v1555 = vmul.f32 %v1442, 1.442695
    %v1556 = vpow.pop %v1555
    %v1557 = vmul.f32 %v1443, 1.442695
    %v1558 = vpow.pop %v1557
    %v1559 = vmul.f32 %v1444, 1.442695
    %v1560 = vpow.pop %v1559
    %v1561 = vmul.f32 %v1445, 1.442695
    %v1562 = vpow.pop %v1561
    %v1563 = vmul.f32 %v1446, 1.442695
    %v1564 = vpow.pop %v1563
    %v1565 = vmul.f32 %v1447, 1.442695
    %v1566 = vpow.pop %v1565
    %v1567 = vmul.f32 %v1448, 1.442695
    %v1568 = vpow.pop %v1567
    %v1569 = vmul.f32 %v1449, 1.442695
    %v1570 = vpow.pop %v1569
    %v1571 = vmul.f32 %v1450, 1.442695
    %v1572 = vpow.pop %v1571
    %v1573 = vmul.f32 %v1451, 1.442695
    %v1574 = vpow.pop %v1573
    %v1575 = vmul.f32 %v1452, 1.442695
    %v1576 = vpow.pop %v1575
    %v1577 = vmul.f32 %v1453, 1.442695
    %v1578 = vpow.pop %v1577
    %v1579 = vmul.f32 %v1454, 1.442695
    %v1580 = vpow.pop %v1579
    %v1581 = vmul.f32 %v1455, 1.442695
    %v1582 = vpow.pop %v1581
    %v1583 = vmul.f32 %v1456, 1.442695
    %v1584 = vpow.pop %v1583
    %v1585 = vlaneseq
    %v1586 = vand.u32 %v1585, 127
    %vm1587 = vcmp.lt.s32.totalorder %v1586, 8
    %v1588 = vsel %vm1587, %v1011, %v1458
    %v1589 = vsel %vm1587, %v1016, %v1460
    %v1590 = vsel %vm1587, %v1021, %v1462
    %v1591 = vsel %vm1587, %v1026, %v1464
    %v1592 = vsel %vm1587, %v1031, %v1466
    %v1593 = vsel %vm1587, %v1036, %v1468
    %v1594 = vsel %vm1587, %v1041, %v1470
    %v1595 = vsel %vm1587, %v1046, %v1472
    %v1596 = vsel %vm1587, %v1051, %v1474
    %v1597 = vsel %vm1587, %v1056, %v1476
    %v1598 = vsel %vm1587, %v1061, %v1478
    %v1599 = vsel %vm1587, %v1066, %v1480
    %v1600 = vsel %vm1587, %v1071, %v1482
    %v1601 = vsel %vm1587, %v1076, %v1484
    %v1602 = vsel %vm1587, %v1081, %v1486
    %v1603 = vsel %vm1587, %v1086, %v1488
    %v1604 = vsel %vm1587, %v1091, %v1490
    %v1605 = vsel %vm1587, %v1096, %v1492
    %v1606 = vsel %vm1587, %v1101, %v1494
    %v1607 = vsel %vm1587, %v1106, %v1496
    %v1608 = vsel %vm1587, %v1111, %v1498
    %v1609 = vsel %vm1587, %v1116, %v1500
    %v1610 = vsel %vm1587, %v1121, %v1502
    %v1611 = vsel %vm1587, %v1126, %v1504
    %v1612 = vsel %vm1587, %v1131, %v1506
    %v1613 = vsel %vm1587, %v1136, %v1508
    %v1614 = vsel %vm1587, %v1141, %v1510
    %v1615 = vsel %vm1587, %v1146, %v1512
    %v1616 = vsel %vm1587, %v1151, %v1514
    %v1617 = vsel %vm1587, %v1156, %v1516
    %v1618 = vsel %vm1587, %v1161, %v1518
    %v1619 = vsel %vm1587, %v1166, %v1520
    %v1620 = vsel %vm1587, %v1171, %v1522
    %v1621 = vsel %vm1587, %v1176, %v1524
    %v1622 = vsel %vm1587, %v1181, %v1526
    %v1623 = vsel %vm1587, %v1186, %v1528
    %v1624 = vsel %vm1587, %v1191, %v1530
    %v1625 = vsel %vm1587, %v1196, %v1532
    %v1626 = vsel %vm1587, %v1201, %v1534
    %v1627 = vsel %vm1587, %v1206, %v1536
    %v1628 = vsel %vm1587, %v1211, %v1538
    %v1629 = vsel %vm1587, %v1216, %v1540
    %v1630 = vsel %vm1587, %v1221, %v1542
    %v1631 = vsel %vm1587, %v1226, %v1544
    %v1632 = vsel %vm1587, %v1231, %v1546
    %v1633 = vsel %vm1587, %v1236, %v1548
    %v1634 = vsel %vm1587, %v1241, %v1550
    %v1635 = vsel %vm1587, %v1246, %v1552
    %v1636 = vsel %vm1587, %v1251, %v1554
    %v1637 = vsel %vm1587, %v1256, %v1556
    %v1638 = vsel %vm1587, %v1261, %v1558
    %v1639 = vsel %vm1587, %v1266, %v1560
    %v1640 = vsel %vm1587, %v1271, %v1562
    %v1641 = vsel %vm1587, %v1276, %v1564
    %v1642 = vsel %vm1587, %v1281, %v1566
    %v1643 = vsel %vm1587, %v1286, %v1568
    %v1644 = vsel %vm1587, %v1291, %v1570
    %v1645 = vsel %vm1587, %v1296, %v1572
    %v1646 = vsel %vm1587, %v1301, %v1574
    %v1647 = vsel %vm1587, %v1306, %v1576
    %v1648 = vsel %vm1587, %v1311, %v1578
    %v1649 = vsel %vm1587, %v1316, %v1580
    %v1650 = vsel %vm1587, %v1321, %v1582
    %v1651 = vsel %vm1587, %v1326, %v1584
    %1652 = vst [vmem:[#allocation2] sm:$0xff] %v1588
    %1653 = vst [vmem:[#allocation2 + $0x8] sm:$0xff] %v1589
    %1654 = vst [vmem:[#allocation2 + $0x10] sm:$0xff] %v1590
    %1655 = vst [vmem:[#allocation2 + $0x18] sm:$0xff] %v1591
    %1656 = vst [vmem:[#allocation2 + $0x20] sm:$0xff] %v1592
    %1657 = vst [vmem:[#allocation2 + $0x28] sm:$0xff] %v1593
    %1658 = vst [vmem:[#allocation2 + $0x30] sm:$0xff] %v1594
    %1659 = vst [vmem:[#allocation2 + $0x38] sm:$0xff] %v1595
    %1660 = vst [vmem:[#allocation2 + $0x40] sm:$0xff] %v1596
    %1661 = vst [vmem:[#allocation2 + $0x48] sm:$0xff] %v1597
    %1662 = vst [vmem:[#allocation2 + $0x50] sm:$0xff] %v1598
    %1663 = vst [vmem:[#allocation2 + $0x58] sm:$0xff] %v1599
    %1664 = vst [vmem:[#allocation2 + $0x60] sm:$0xff] %v1600
    %1665 = vst [vmem:[#allocation2 + $0x68] sm:$0xff] %v1601
    %1666 = vst [vmem:[#allocation2 + $0x70] sm:$0xff] %v1602
    %1667 = vst [vmem:[#allocation2 + $0x78] sm:$0xff] %v1603
    %1668 = vst [vmem:[#allocation2 + $0x80] sm:$0xff] %v1604
    %1669 = vst [vmem:[#allocation2 + $0x88] sm:$0xff] %v1605
    %1670 = vst [vmem:[#allocation2 + $0x90] sm:$0xff] %v1606
    %1671 = vst [vmem:[#allocation2 + $0x98] sm:$0xff] %v1607
    %1672 = vst [vmem:[#allocation2 + $0xa0] sm:$0xff] %v1608
    %1673 = vst [vmem:[#allocation2 + $0xa8] sm:$0xff] %v1609
    %1674 = vst [vmem:[#allocation2 + $0xb0] sm:$0xff] %v1610
    %1675 = vst [vmem:[#allocation2 + $0xb8] sm:$0xff] %v1611
    %1676 = vst [vmem:[#allocation2 + $0xc0] sm:$0xff] %v1612
    %1677 = vst [vmem:[#allocation2 + $0xc8] sm:$0xff] %v1613
    %1678 = vst [vmem:[#allocation2 + $0xd0] sm:$0xff] %v1614
    %1679 = vst [vmem:[#allocation2 + $0xd8] sm:$0xff] %v1615
    %1680 = vst [vmem:[#allocation2 + $0xe0] sm:$0xff] %v1616
    %1681 = vst [vmem:[#allocation2 + $0xe8] sm:$0xff] %v1617
    %1682 = vst [vmem:[#allocation2 + $0xf0] sm:$0xff] %v1618
    %1683 = vst [vmem:[#allocation2 + $0xf8] sm:$0xff] %v1619
    %1684 = vst [vmem:[#allocation2 + $0x100] sm:$0xff] %v1620
    %1685 = vst [vmem:[#allocation2 + $0x108] sm:$0xff] %v1621
    %1686 = vst [vmem:[#allocation2 + $0x110] sm:$0xff] %v1622
    %1687 = vst [vmem:[#allocation2 + $0x118] sm:$0xff] %v1623
    %1688 = vst [vmem:[#allocation2 + $0x120] sm:$0xff] %v1624
    %1689 = vst [vmem:[#allocation2 + $0x128] sm:$0xff] %v1625
    %1690 = vst [vmem:[#allocation2 + $0x130] sm:$0xff] %v1626
    %1691 = vst [vmem:[#allocation2 + $0x138] sm:$0xff] %v1627
    %1692 = vst [vmem:[#allocation2 + $0x140] sm:$0xff] %v1628
    %1693 = vst [vmem:[#allocation2 + $0x148] sm:$0xff] %v1629
    %1694 = vst [vmem:[#allocation2 + $0x150] sm:$0xff] %v1630
    %1695 = vst [vmem:[#allocation2 + $0x158] sm:$0xff] %v1631
    %1696 = vst [vmem:[#allocation2 + $0x160] sm:$0xff] %v1632
    %1697 = vst [vmem:[#allocation2 + $0x168] sm:$0xff] %v1633
    %1698 = vst [vmem:[#allocation2 + $0x170] sm:$0xff] %v1634
    %1699 = vst [vmem:[#allocation2 + $0x178] sm:$0xff] %v1635
    %1700 = vst [vmem:[#allocation2 + $0x180] sm:$0xff] %v1636
    %1701 = vst [vmem:[#allocation2 + $0x188] sm:$0xff] %v1637
    %1702 = vst [vmem:[#allocation2 + $0x190] sm:$0xff] %v1638
    %1703 = vst [vmem:[#allocation2 + $0x198] sm:$0xff] %v1639
    %1704 = vst [vmem:[#allocation2 + $0x1a0] sm:$0xff] %v1640
    %1705 = vst [vmem:[#allocation2 + $0x1a8] sm:$0xff] %v1641
    %1706 = vst [vmem:[#allocation2 + $0x1b0] sm:$0xff] %v1642
    %1707 = vst [vmem:[#allocation2 + $0x1b8] sm:$0xff] %v1643
    %1708 = vst [vmem:[#allocation2 + $0x1c0] sm:$0xff] %v1644
    %1709 = vst [vmem:[#allocation2 + $0x1c8] sm:$0xff] %v1645
    %1710 = vst [vmem:[#allocation2 + $0x1d0] sm:$0xff] %v1646
    %1711 = vst [vmem:[#allocation2 + $0x1d8] sm:$0xff] %v1647
    %1712 = vst [vmem:[#allocation2 + $0x1e0] sm:$0xff] %v1648
    %1713 = vst [vmem:[#allocation2 + $0x1e8] sm:$0xff] %v1649
    %1714 = vst [vmem:[#allocation2 + $0x1f0] sm:$0xff] %v1650
    %1715 = vst [vmem:[#allocation2 + $0x1f8] sm:$0xff] %v1651
    // Predicated region
    $region22: #{tpu_custom_call.1} parent=1 // pred_check
      _
    $region23: #{tpu_custom_call.1} parent=1 // pred_check_branch
      %1717 = sbr.rel (0) target = $region25
    $region24: #{tpu_custom_call.1} parent=1 // pred_region
      %s1719 = ssub.s32 8192, 8192
      %1720 = vsyncadd [#allocation3], %s1719
      %s1721 = sshll.u32 [#allocation2], 4
      %s1722 = int_to_ptr.vmem [resolvable:$true] %s1721
      %1727 = dma.vmem_to_hbm [thread:$0]  %s1722, 8192, %s5, [#allocation3], 128, 128, 8
    $region25: #{tpu_custom_call.1} parent=1 // pred_fallthru
      _
    // Predicated region
    $region26: #{tpu_custom_call.1} parent=1 // pred_check
      _
    $region27: #{tpu_custom_call.1} parent=1 // pred_check_branch
      %1729 = sbr.rel (0) target = $region29
    $region28: #{tpu_custom_call.1} parent=1 // pred_region
      %1730 = dma.done [#allocation3], 8192
    $region29: #{tpu_custom_call.1} parent=1 // pred_fallthru
      _
    %1731 = vsyncpa [#allocation3], 1

</llo_original>
